<compile_context>
chip_gen: v6e
topology: v6e:2x2x1
jax: 0.10.0
libtpu: 0.0.40
codegen_flags: <defaults>
</compile_context>

<pallas_src>
import functools

import jax
import jax.numpy as jnp
from jax.experimental import pallas as pl
from jax.experimental.pallas import tpu as pltpu

C_PAD = 128  # lane-dense padded channel width


# ----------------------------- Pallas kernel --------------------------------

def _gnn_fused_kernel(x_ref, a_ref, w1_ref, r1_ref, b1_ref,
                      w2_ref, r2_ref, b2_ref, o_ref, *, num_rel):
    """Fused 2-layer RGCN forward. Single grid step; all operands in VMEM.

    x_ref : (N, C_PAD)            bf16 padded node features
    a_ref : (R*N, N)              bf16 normalized dense adjacency (mean aggr),
                                  relations stacked along rows
    w?_ref: (R*C_PAD, C_PAD)      bf16 stacked block-diagonal relation weights
    r?_ref: (C_PAD, C_PAD)        bf16 zero-padded root weight
    b?_ref: (1, C_PAD)            f32 zero-padded bias
    o_ref : (N, C_PAD)            f32 padded output
    """
    n, c_pad = x_ref.shape

    def layer(h, w_ref, root_ref, b_ref):
        # (1) All-relation aggregation as ONE MXU matmul: (R*N,N)@(N,C) -> f32,
        #     then cast back to bf16 for the per-relation weight dots.
        agg = jnp.dot(a_ref[...], h,
                      preferred_element_type=jnp.float32).astype(jnp.bfloat16)
        # (2) Root term + bias; f32 accumulator lives in vregs (no VMEM scratch).
        acc = jnp.dot(h, root_ref[...],
                      preferred_element_type=jnp.float32) + b_ref[...]
        # (3) Per-relation block-diagonal weight dots, accumulated in f32.
        #     (static unroll, R is small)
        for r in range(num_rel):
            acc = acc + jnp.dot(
                agg[r * n:(r + 1) * n, :],
                w_ref[r * c_pad:(r + 1) * c_pad, :],
                preferred_element_type=jnp.float32)
        return acc

    h1 = layer(x_ref[...], w1_ref, r1_ref, b1_ref)
    # F.dropout(p=0.2) is identity in eval mode.
    # TODO(synk): training-mode dropout would use pltpu.prng_seed/prng_random_bits.
    o_ref[...] = layer(h1.astype(jnp.bfloat16), w2_ref, r2_ref, b2_ref
                       ).astype(o_ref.dtype)


def fused_rgcn_forward(x_pad, a_flat, w1_stack, root1, b1_pad,
                       w2_stack, root2, b2_pad, num_relations):
    """x_pad: (N, C_PAD) bf16, a_flat: (R*N, N) bf16,
    w?_stack: (R*C_PAD, C_PAD) bf16, root?: (C_PAD, C_PAD) bf16,
    b?_pad: (1, C_PAD) f32 -> padded f32 output (N, C_PAD)."""
    n, c_pad = x_pad.shape
    rn = a_flat.shape[0]
    k_dim = num_relations * c_pad

    kernel = functools.partial(_gnn_fused_kernel, num_rel=num_relations)

    return pl.pallas_call(
        kernel,
        out_shape=jax.ShapeDtypeStruct((n, c_pad), jnp.float32),
        grid_spec=pltpu.PrefetchScalarGridSpec(
            num_scalar_prefetch=0,
            grid=(1,),
            in_specs=[
                pl.BlockSpec((n, c_pad), lambda i: (0, 0)),       # x_pad
                pl.BlockSpec((rn, n), lambda i: (0, 0)),          # A (R*N, N)
                pl.BlockSpec((k_dim, c_pad), lambda i: (0, 0)),   # W1 stack
                pl.BlockSpec((c_pad, c_pad), lambda i: (0, 0)),   # root1
                pl.BlockSpec((1, c_pad), lambda i: (0, 0)),       # bias1
                pl.BlockSpec((k_dim, c_pad), lambda i: (0, 0)),   # W2 stack
                pl.BlockSpec((c_pad, c_pad), lambda i: (0, 0)),   # root2
                pl.BlockSpec((1, c_pad), lambda i: (0, 0)),       # bias2
            ],
            out_specs=pl.BlockSpec((n, c_pad), lambda i: (0, 0)),
        ),
        compiler_params=pltpu.CompilerParams(
            dimension_semantics=("arbitrary",)),
    )(x_pad, a_flat, w1_stack, root1, b1_pad, w2_stack, root2, b2_pad)


# ------------------------------- JAX glue ------------------------------------

def build_norm_adj(edge_index, edge_type, num_nodes, num_relations):
    """Dense per-relation adjacency with scatter-mean normalization.
    A_norm[r, t, s] = count(edges s->t, rel r) / in_degree_r(t), 0 if deg==0."""
    src, dst = edge_index[0], edge_index[1]
    a = jnp.zeros((num_relations, num_nodes, num_nodes), jnp.float32)
    a = a.at[edge_type, dst, src].add(1.0)
    deg = a.sum(axis=2, keepdims=True)
    return jnp.where(deg > 0, a / jnp.maximum(deg, 1.0), 0.0)


def block_diag_expand(w):
    """(R, B, cinb, coutb) -> block-diagonal (R, B*cinb, B*coutb)."""
    r, b, cinb, coutb = w.shape
    eye = jnp.eye(b, dtype=w.dtype)
    wbd = jnp.einsum('rbij,bc->rbicj', w, eye)
    return wbd.reshape(r, b * cinb, b * coutb)


def _pad2d(a, rows, cols):
    return jnp.pad(a, ((0, rows - a.shape[0]), (0, cols - a.shape[1])))


def stack_and_pad_layer(conv_params, num_relations, c_pad):
    """Returns (w_stack (R*c_pad, c_pad) bf16, root (c_pad, c_pad) bf16,
    bias (1, c_pad) f32), zero-padded so padding lanes stay exactly zero."""
    w_bd = block_diag_expand(conv_params["weight"])      # (R, c_in, c_out)
    blocks = [_pad2d(w_bd[r], c_pad, c_pad) for r in range(num_relations)]
    w_stack = jnp.concatenate(blocks, axis=0).astype(jnp.bfloat16)
    root_pad = _pad2d(conv_params["root"], c_pad, c_pad).astype(jnp.bfloat16)
    bias = conv_params["bias"]
    bias_pad = jnp.pad(bias, (0, c_pad - bias.shape[0])).reshape(1, c_pad)
    return w_stack, root_pad, bias_pad.astype(jnp.float32)


def xavier_uniform(key, shape, fan_in, fan_out):
    bound = (6.0 / (fan_in + fan_out)) ** 0.5
    return jax.random.uniform(key, shape, jnp.float32, -bound, bound)


def init_gnn_encoder_params(key, num_nodes, input_channels, hidden_channels,
                            output_channels, num_relations, num_blocks=5):
    assert input_channels % num_blocks == 0
    assert hidden_channels % num_blocks == 0
    assert output_channels % num_blocks == 0
    ks = jax.random.split(key, 5)
    cinb1, coutb1 = input_channels // num_blocks, hidden_channels // num_blocks
    cinb2, coutb2 = hidden_channels // num_blocks, output_channels // num_blocks
    return {
        "node_emb": xavier_uniform(ks[0], (num_nodes, input_channels),
                                   input_channels, num_nodes),
        "conv1": {
            "weight": xavier_uniform(
                ks[1], (num_relations, num_blocks, cinb1, coutb1), cinb1, coutb1),
            "root": xavier_uniform(ks[2], (input_channels, hidden_channels),
                                   input_channels, hidden_channels),
            "bias": jnp.zeros((hidden_channels,), jnp.float32),
        },
        "conv2": {
            "weight": xavier_uniform(
                ks[3], (num_relations, num_blocks, cinb2, coutb2), cinb2, coutb2),
            "root": xavier_uniform(ks[4], (hidden_channels, output_channels),
                                   hidden_channels, output_channels),
            "bias": jnp.zeros((output_channels,), jnp.float32),
        },
    }


def gnn_encoder_forward(params, edge_index, edge_type, num_relations):
    """Matches GNNEncoder.forward for gnn_model='rgcn' (eval mode)."""
    x = params["node_emb"]
    num_nodes, _ = x.shape
    c_out = params["conv2"]["root"].shape[1]

    a_norm = build_norm_adj(edge_index, edge_type, num_nodes, num_relations)
    # Flatten relations along rows for the single fused aggregation matmul,
    # and cast MXU operands to bf16 (f32 accumulation happens in-kernel).
    a_flat = a_norm.reshape(num_relations * num_nodes,
                            num_nodes).astype(jnp.bfloat16)

    w1, r1, b1 = stack_and_pad_layer(params["conv1"], num_relations, C_PAD)
    w2, r2, b2 = stack_and_pad_layer(params["conv2"], num_relations, C_PAD)
    x_pad = _pad2d(x, num_nodes, C_PAD).astype(jnp.bfloat16)

    out_pad = fused_rgcn_forward(x_pad, a_flat, w1, r1, b1, w2, r2, b2,
                                 num_relations)
    return out_pad[:, :c_out]


# --------------------------- pure-JAX reference -------------------------------

def gnn_encoder_reference(params, edge_index, edge_type, num_relations):
    x = params["node_emb"]
    num_nodes = x.shape[0]
    a_norm = build_norm_adj(edge_index, edge_type, num_nodes, num_relations)

    def layer(h, conv):
        w_bd = block_diag_expand(conv["weight"])
        agg = jnp.einsum('rts,sc->rtc', a_norm, h)
        rel = jnp.einsum('rtc,rcd->td', agg, w_bd)
        return rel + h @ conv["root"] + conv["bias"]

    h1 = layer(x, params["conv1"])
    return layer(h1, params["conv2"])


# --------------------------------- main --------------------------------------

if __name__ == "__main__":
    num_nodes = 64
    input_channels = 20       # divisible by num_blocks=5
    hidden_channels = 40
    output_channels = 20
    num_relations = 3
    num_blocks = 5
    num_edges = 256

    key = jax.random.PRNGKey(0)
    k_param, k_src, k_dst, k_rel = jax.random.split(key, 4)

    params = init_gnn_encoder_params(
        k_param, num_nodes, input_channels, hidden_channels,
        output_channels, num_relations, num_blocks)

    edge_index = jnp.stack([
        jax.random.randint(k_src, (num_edges,), 0, num_nodes),
        jax.random.randint(k_dst, (num_edges,), 0, num_nodes),
    ], axis=0).astype(jnp.int32)
    edge_type = jax.random.randint(k_rel, (num_edges,), 0,
                                   num_relations).astype(jnp.int32)

    out = gnn_encoder_forward(params, edge_index, edge_type, num_relations)
    out = jax.block_until_ready(out)

    assert out.shape == (num_nodes, output_channels), out.shape
    assert jnp.all(jnp.isfinite(out))

    ref = gnn_encoder_reference(params, edge_index, edge_type, num_relations)
    ref = jax.block_until_ready(ref)
    # bf16 MXU operands with f32 accumulation vs. an all-f32 reference.
    assert jnp.allclose(out, ref, rtol=2e-2, atol=2e-2), (
        float(jnp.max(jnp.abs(out - ref))))

    print("KERNEL_OK")
</pallas_src>

<mosaic_0001>
module attributes {stable_mosaic.version = 11 : i64} {
  func.func @_gnn_fused_kernel(%arg0: i32, %arg1: memref<64x128xbf16, #tpu.memory_space<vmem>>, %arg2: memref<192x64xbf16, #tpu.memory_space<vmem>>, %arg3: memref<384x128xbf16, #tpu.memory_space<vmem>>, %arg4: memref<128x128xbf16, #tpu.memory_space<vmem>>, %arg5: memref<1x128xf32, #tpu.memory_space<vmem>>, %arg6: memref<384x128xbf16, #tpu.memory_space<vmem>>, %arg7: memref<128x128xbf16, #tpu.memory_space<vmem>>, %arg8: memref<1x128xf32, #tpu.memory_space<vmem>>, %arg9: memref<64x128xf32, #tpu.memory_space<vmem>>) attributes {dimension_semantics = [#tpu.dimension_semantics<arbitrary>], iteration_bounds = array<i64: 1>, scalar_prefetch = 0 : i64, scratch_operands = 0 : i64, tpu.core_type = #tpu.core_type<tc>, window_params = [{pipeline_mode = #tpu.pipeline_mode<synchronous>, transform_indices = @transform_0, window_bounds = array<i64: 64, 128>}, {pipeline_mode = #tpu.pipeline_mode<synchronous>, transform_indices = @transform_1, window_bounds = array<i64: 192, 64>}, {pipeline_mode = #tpu.pipeline_mode<synchronous>, transform_indices = @transform_2, window_bounds = array<i64: 384, 128>}, {pipeline_mode = #tpu.pipeline_mode<synchronous>, transform_indices = @transform_3, window_bounds = array<i64: 128, 128>}, {pipeline_mode = #tpu.pipeline_mode<synchronous>, transform_indices = @transform_4, window_bounds = array<i64: 1, 128>}, {pipeline_mode = #tpu.pipeline_mode<synchronous>, transform_indices = @transform_5, window_bounds = array<i64: 384, 128>}, {pipeline_mode = #tpu.pipeline_mode<synchronous>, transform_indices = @transform_6, window_bounds = array<i64: 128, 128>}, {pipeline_mode = #tpu.pipeline_mode<synchronous>, transform_indices = @transform_7, window_bounds = array<i64: 1, 128>}, {pipeline_mode = #tpu.pipeline_mode<synchronous>, transform_indices = @transform_8, window_bounds = array<i64: 64, 128>}]} {
    %c0 = arith.constant 0 : index
    %c0_0 = arith.constant 0 : index
    %0 = vector.load %arg1[%c0, %c0_0] : memref<64x128xbf16, #tpu.memory_space<vmem>>, vector<64x128xbf16>
    %c0_1 = arith.constant 0 : index
    %c0_2 = arith.constant 0 : index
    %1 = vector.load %arg2[%c0_1, %c0_2] : memref<192x64xbf16, #tpu.memory_space<vmem>>, vector<192x64xbf16>
    %cst = arith.constant dense<0.000000e+00> : vector<192x128xf32>
    %2 = tpu.matmul %1, %0, %cst {dimension_numbers = #tpu.dot_dimension_numbers<[1], [0], [0], [1], [0, 0, 1, 1], [], []>} : vector<192x64xbf16>, vector<64x128xbf16>, vector<192x128xf32> -> vector<192x128xf32>
    %3 = arith.truncf %2 : vector<192x128xf32> to vector<192x128xbf16>
    %c0_3 = arith.constant 0 : index
    %c0_4 = arith.constant 0 : index
    %4 = vector.load %arg4[%c0_3, %c0_4] : memref<128x128xbf16, #tpu.memory_space<vmem>>, vector<128x128xbf16>
    %cst_5 = arith.constant dense<0.000000e+00> : vector<64x128xf32>
    %5 = tpu.matmul %0, %4, %cst_5 {dimension_numbers = #tpu.dot_dimension_numbers<[1], [0], [0], [1], [0, 0, 1, 1], [], []>} : vector<64x128xbf16>, vector<128x128xbf16>, vector<64x128xf32> -> vector<64x128xf32>
    %c0_6 = arith.constant 0 : index
    %c0_7 = arith.constant 0 : index
    %6 = vector.load %arg5[%c0_6, %c0_7] : memref<1x128xf32, #tpu.memory_space<vmem>>, vector<1x128xf32>
    %7 = vector.broadcast %6 : vector<1x128xf32> to vector<64x128xf32>
    %8 = arith.addf %5, %7 : vector<64x128xf32>
    %9 = vector.extract_strided_slice %3 {offsets = [0, 0], sizes = [64, 128], strides = [1, 1]} : vector<192x128xbf16> to vector<64x128xbf16>
    %c0_8 = arith.constant 0 : index
    %c0_9 = arith.constant 0 : index
    %10 = vector.load %arg3[%c0_8, %c0_9] : memref<384x128xbf16, #tpu.memory_space<vmem>>, vector<128x128xbf16>
    %cst_10 = arith.constant dense<0.000000e+00> : vector<64x128xf32>
    %11 = tpu.matmul %9, %10, %cst_10 {dimension_numbers = #tpu.dot_dimension_numbers<[1], [0], [0], [1], [0, 0, 1, 1], [], []>} : vector<64x128xbf16>, vector<128x128xbf16>, vector<64x128xf32> -> vector<64x128xf32>
    %12 = arith.addf %8, %11 : vector<64x128xf32>
    %13 = vector.extract_strided_slice %3 {offsets = [64, 0], sizes = [64, 128], strides = [1, 1]} : vector<192x128xbf16> to vector<64x128xbf16>
    %c128 = arith.constant 128 : index
    %c0_11 = arith.constant 0 : index
    %14 = vector.load %arg3[%c128, %c0_11] : memref<384x128xbf16, #tpu.memory_space<vmem>>, vector<128x128xbf16>
    %cst_12 = arith.constant dense<0.000000e+00> : vector<64x128xf32>
    %15 = tpu.matmul %13, %14, %cst_12 {dimension_numbers = #tpu.dot_dimension_numbers<[1], [0], [0], [1], [0, 0, 1, 1], [], []>} : vector<64x128xbf16>, vector<128x128xbf16>, vector<64x128xf32> -> vector<64x128xf32>
    %16 = arith.addf %12, %15 : vector<64x128xf32>
    %17 = vector.extract_strided_slice %3 {offsets = [128, 0], sizes = [64, 128], strides = [1, 1]} : vector<192x128xbf16> to vector<64x128xbf16>
    %c256 = arith.constant 256 : index
    %c0_13 = arith.constant 0 : index
    %18 = vector.load %arg3[%c256, %c0_13] : memref<384x128xbf16, #tpu.memory_space<vmem>>, vector<128x128xbf16>
    %cst_14 = arith.constant dense<0.000000e+00> : vector<64x128xf32>
    %19 = tpu.matmul %17, %18, %cst_14 {dimension_numbers = #tpu.dot_dimension_numbers<[1], [0], [0], [1], [0, 0, 1, 1], [], []>} : vector<64x128xbf16>, vector<128x128xbf16>, vector<64x128xf32> -> vector<64x128xf32>
    %20 = arith.addf %16, %19 : vector<64x128xf32>
    %21 = arith.truncf %20 : vector<64x128xf32> to vector<64x128xbf16>
    %c0_15 = arith.constant 0 : index
    %c0_16 = arith.constant 0 : index
    %22 = vector.load %arg2[%c0_15, %c0_16] : memref<192x64xbf16, #tpu.memory_space<vmem>>, vector<192x64xbf16>
    %cst_17 = arith.constant dense<0.000000e+00> : vector<192x128xf32>
    %23 = tpu.matmul %22, %21, %cst_17 {dimension_numbers = #tpu.dot_dimension_numbers<[1], [0], [0], [1], [0, 0, 1, 1], [], []>} : vector<192x64xbf16>, vector<64x128xbf16>, vector<192x128xf32> -> vector<192x128xf32>
    %24 = arith.truncf %23 : vector<192x128xf32> to vector<192x128xbf16>
    %c0_18 = arith.constant 0 : index
    %c0_19 = arith.constant 0 : index
    %25 = vector.load %arg7[%c0_18, %c0_19] : memref<128x128xbf16, #tpu.memory_space<vmem>>, vector<128x128xbf16>
    %cst_20 = arith.constant dense<0.000000e+00> : vector<64x128xf32>
    %26 = tpu.matmul %21, %25, %cst_20 {dimension_numbers = #tpu.dot_dimension_numbers<[1], [0], [0], [1], [0, 0, 1, 1], [], []>} : vector<64x128xbf16>, vector<128x128xbf16>, vector<64x128xf32> -> vector<64x128xf32>
    %c0_21 = arith.constant 0 : index
    %c0_22 = arith.constant 0 : index
    %27 = vector.load %arg8[%c0_21, %c0_22] : memref<1x128xf32, #tpu.memory_space<vmem>>, vector<1x128xf32>
    %28 = vector.broadcast %27 : vector<1x128xf32> to vector<64x128xf32>
    %29 = arith.addf %26, %28 : vector<64x128xf32>
    %30 = vector.extract_strided_slice %24 {offsets = [0, 0], sizes = [64, 128], strides = [1, 1]} : vector<192x128xbf16> to vector<64x128xbf16>
    %c0_23 = arith.constant 0 : index
    %c0_24 = arith.constant 0 : index
    %31 = vector.load %arg6[%c0_23, %c0_24] : memref<384x128xbf16, #tpu.memory_space<vmem>>, vector<128x128xbf16>
    %cst_25 = arith.constant dense<0.000000e+00> : vector<64x128xf32>
    %32 = tpu.matmul %30, %31, %cst_25 {dimension_numbers = #tpu.dot_dimension_numbers<[1], [0], [0], [1], [0, 0, 1, 1], [], []>} : vector<64x128xbf16>, vector<128x128xbf16>, vector<64x128xf32> -> vector<64x128xf32>
    %33 = arith.addf %29, %32 : vector<64x128xf32>
    %34 = vector.extract_strided_slice %24 {offsets = [64, 0], sizes = [64, 128], strides = [1, 1]} : vector<192x128xbf16> to vector<64x128xbf16>
    %c128_26 = arith.constant 128 : index
    %c0_27 = arith.constant 0 : index
    %35 = vector.load %arg6[%c128_26, %c0_27] : memref<384x128xbf16, #tpu.memory_space<vmem>>, vector<128x128xbf16>
    %cst_28 = arith.constant dense<0.000000e+00> : vector<64x128xf32>
    %36 = tpu.matmul %34, %35, %cst_28 {dimension_numbers = #tpu.dot_dimension_numbers<[1], [0], [0], [1], [0, 0, 1, 1], [], []>} : vector<64x128xbf16>, vector<128x128xbf16>, vector<64x128xf32> -> vector<64x128xf32>
    %37 = arith.addf %33, %36 : vector<64x128xf32>
    %38 = vector.extract_strided_slice %24 {offsets = [128, 0], sizes = [64, 128], strides = [1, 1]} : vector<192x128xbf16> to vector<64x128xbf16>
    %c256_29 = arith.constant 256 : index
    %c0_30 = arith.constant 0 : index
    %39 = vector.load %arg6[%c256_29, %c0_30] : memref<384x128xbf16, #tpu.memory_space<vmem>>, vector<128x128xbf16>
    %cst_31 = arith.constant dense<0.000000e+00> : vector<64x128xf32>
    %40 = tpu.matmul %38, %39, %cst_31 {dimension_numbers = #tpu.dot_dimension_numbers<[1], [0], [0], [1], [0, 0, 1, 1], [], []>} : vector<64x128xbf16>, vector<128x128xbf16>, vector<64x128xf32> -> vector<64x128xf32>
    %41 = arith.addf %37, %40 : vector<64x128xf32>
    %c0_32 = arith.constant 0 : index
    %c0_33 = arith.constant 0 : index
    %42 = vector.load %arg9[%c0_32, %c0_33] : memref<64x128xf32, #tpu.memory_space<vmem>>, vector<64x128xf32>
    tpu.vector_store %arg9[%c0_32, %c0_33], %41 {strides = array<i32>} : memref<64x128xf32, #tpu.memory_space<vmem>>, vector<64x128xf32>,
    return
  }
  func.func @transform_0(%arg0: i32) -> (i32, i32) {
    %c0_i32 = arith.constant 0 : i32
    %c0_i32_0 = arith.constant 0 : i32
    %c0_i32_1 = arith.constant 0 : i32
    return %c0_i32, %c0_i32_0 : i32, i32
  }
  func.func @transform_1(%arg0: i32) -> (i32, i32) {
    %c0_i32 = arith.constant 0 : i32
    %c0_i32_0 = arith.constant 0 : i32
    %c0_i32_1 = arith.constant 0 : i32
    return %c0_i32, %c0_i32_0 : i32, i32
  }
  func.func @transform_2(%arg0: i32) -> (i32, i32) {
    %c0_i32 = arith.constant 0 : i32
    %c0_i32_0 = arith.constant 0 : i32
    %c0_i32_1 = arith.constant 0 : i32
    return %c0_i32, %c0_i32_0 : i32, i32
  }
  func.func @transform_3(%arg0: i32) -> (i32, i32) {
    %c0_i32 = arith.constant 0 : i32
    %c0_i32_0 = arith.constant 0 : i32
    %c0_i32_1 = arith.constant 0 : i32
    return %c0_i32, %c0_i32_0 : i32, i32
  }
  func.func @transform_4(%arg0: i32) -> (i32, i32) {
    %c0_i32 = arith.constant 0 : i32
    %c0_i32_0 = arith.constant 0 : i32
    %c0_i32_1 = arith.constant 0 : i32
    return %c0_i32, %c0_i32_0 : i32, i32
  }
  func.func @transform_5(%arg0: i32) -> (i32, i32) {
    %c0_i32 = arith.constant 0 : i32
    %c0_i32_0 = arith.constant 0 : i32
    %c0_i32_1 = arith.constant 0 : i32
    return %c0_i32, %c0_i32_0 : i32, i32
  }
  func.func @transform_6(%arg0: i32) -> (i32, i32) {
    %c0_i32 = arith.constant 0 : i32
    %c0_i32_0 = arith.constant 0 : i32
    %c0_i32_1 = arith.constant 0 : i32
    return %c0_i32, %c0_i32_0 : i32, i32
  }
  func.func @transform_7(%arg0: i32) -> (i32, i32) {
    %c0_i32 = arith.constant 0 : i32
    %c0_i32_0 = arith.constant 0 : i32
    %c0_i32_1 = arith.constant 0 : i32
    return %c0_i32, %c0_i32_0 : i32, i32
  }
  func.func @transform_8(%arg0: i32) -> (i32, i32) {
    %c0_i32 = arith.constant 0 : i32
    %c0_i32_0 = arith.constant 0 : i32
    %c0_i32_1 = arith.constant 0 : i32
    return %c0_i32, %c0_i32_0 : i32, i32
  }
}

</mosaic_0001>

<llo_original>
// kernel: tpu_custom_call.1
$region0: #{tpu_custom_call.1}
  #allocation0 [shape = 'u32[]', space=smem, size = 0x4, offset = 0x4, fixed_abs, tag = 'smem constant byte address 0x4 - core index']
  #allocation1 [shape = 'u32[144,128]{1,0:T(1,128)}', space=vmem, size = 0x12000, scoped, tag = 'internal scratch']
  %s0 = inlined_call_operand.vmem [shape: bf16[64,128], index: 0, kind: input, shape index: {}]
  %s1 = inlined_call_operand.vmem [shape: bf16[192,64], index: 1, kind: input, shape index: {}]
  %s2 = inlined_call_operand.hbm [shape: bf16[384,128], index: 2, kind: input, shape index: {}]
  %s3 = inlined_call_operand.vmem [shape: bf16[128,128], index: 3, kind: input, shape index: {}]
  %s4 = inlined_call_operand.vmem [shape: f32[1,128], index: 4, kind: input, shape index: {}]
  %s5 = inlined_call_operand.hbm [shape: bf16[384,128], index: 5, kind: input, shape index: {}]
  %s6 = inlined_call_operand.vmem [shape: bf16[128,128], index: 6, kind: input, shape index: {}]
  %s7 = inlined_call_operand.vmem [shape: f32[1,128], index: 7, kind: input, shape index: {}]
  %s8 = inlined_call_operand.hbm [shape: f32[64,128], index: 8, kind: output, shape index: {}]
  %s9 = sld [smem:[#allocation0]]
  $region50: #{tpu_custom_call.1} parent=0
    _
  %s11 = ssub.s32 1, %s9
  %s12 = scalar_select 0, %s11, %s9
  $region1: #{tpu_custom_call.1} parent=0
    #allocation2 [shape = 'u8[98304]{0}', space=vmem, size = 0x18000, scoped, tag = 'input window, operand 2, single buffered']
    #allocation3 [shape = 's32[1]{0}', space=sflag, size = 0x4, scoped, tag = 'scoped memory for tpu_custom_call.1']
    #allocation4 [shape = 's32[1]{0}', space=sflag, size = 0x4, scoped, tag = 'scoped memory for tpu_custom_call.1']
    #allocation5 [shape = 'u8[98304]{0}', space=vmem, size = 0x18000, scoped, tag = 'input window, operand 5, single buffered']
    #allocation6 [shape = 's32[1]{0}', space=sflag, size = 0x4, scoped, tag = 'scoped memory for tpu_custom_call.1']
    #allocation7 [shape = 'u8[32768]{0}', space=vmem, size = 0x8000, scoped, tag = 'output window, operand 0, single buffered']
    %13 = vsyncpa [#allocation3], 0
    %14 = vsyncpa [#allocation6], 0
    %15 = vsyncpa [#allocation4], 0
    // Predicated region
    $region2: #{tpu_custom_call.1} parent=1 // pred_check
      _
    $region3: #{tpu_custom_call.1} parent=1 // pred_check_branch
      %17 = sbr.rel (0) target = $region5
    $region4: #{tpu_custom_call.1} parent=1 // pred_region
      _
    $region5: #{tpu_custom_call.1} parent=1 // pred_fallthru
      _
    // Predicated region
    $region6: #{tpu_custom_call.1} parent=1 // pred_check
      _
    $region7: #{tpu_custom_call.1} parent=1 // pred_check_branch
      %19 = sbr.rel (0) target = $region9
    $region8: #{tpu_custom_call.1} parent=1 // pred_region
      _
    $region9: #{tpu_custom_call.1} parent=1 // pred_fallthru
      _
    // Predicated region
    $region10: #{tpu_custom_call.1} parent=1 // pred_check
      _
    $region11: #{tpu_custom_call.1} parent=1 // pred_check_branch
      %21 = sbr.rel (0) target = $region13
    $region12: #{tpu_custom_call.1} parent=1 // pred_region
      %s23 = ssub.s32 3072, 3072
      %24 = vsyncadd [#allocation3], %s23
      %s25 = sshll.u32 [#allocation2], 4
      %s26 = int_to_ptr.vmem [resolvable:$true] %s25
      %31 = dma.hbm_to_vmem [thread:$0]  %s2, 3072, %s26, [#allocation3], 64, 64, 4
    $region13: #{tpu_custom_call.1} parent=1 // pred_fallthru
      _
    // Predicated region
    $region14: #{tpu_custom_call.1} parent=1 // pred_check
      _
    $region15: #{tpu_custom_call.1} parent=1 // pred_check_branch
      %33 = sbr.rel (0) target = $region17
    $region16: #{tpu_custom_call.1} parent=1 // pred_region
      _
    $region17: #{tpu_custom_call.1} parent=1 // pred_fallthru
      _
    // Predicated region
    $region18: #{tpu_custom_call.1} parent=1 // pred_check
      _
    $region19: #{tpu_custom_call.1} parent=1 // pred_check_branch
      %35 = sbr.rel (0) target = $region21
    $region20: #{tpu_custom_call.1} parent=1 // pred_region
      _
    $region21: #{tpu_custom_call.1} parent=1 // pred_fallthru
      _
    // Predicated region
    $region22: #{tpu_custom_call.1} parent=1 // pred_check
      _
    $region23: #{tpu_custom_call.1} parent=1 // pred_check_branch
      %37 = sbr.rel (0) target = $region25
    $region24: #{tpu_custom_call.1} parent=1 // pred_region
      %s39 = ssub.s32 3072, 3072
      %40 = vsyncadd [#allocation6], %s39
      %s41 = sshll.u32 [#allocation5], 4
      %s42 = int_to_ptr.vmem [resolvable:$true] %s41
      %47 = dma.hbm_to_vmem [thread:$0]  %s5, 3072, %s42, [#allocation6], 64, 64, 4
    $region25: #{tpu_custom_call.1} parent=1 // pred_fallthru
      _
    // Predicated region
    $region26: #{tpu_custom_call.1} parent=1 // pred_check
      _
    $region27: #{tpu_custom_call.1} parent=1 // pred_check_branch
      %49 = sbr.rel (0) target = $region29
    $region28: #{tpu_custom_call.1} parent=1 // pred_region
      _
    $region29: #{tpu_custom_call.1} parent=1 // pred_fallthru
      _
    // Predicated region
    $region30: #{tpu_custom_call.1} parent=1 // pred_check
      _
    $region31: #{tpu_custom_call.1} parent=1 // pred_check_branch
      %51 = sbr.rel (0) target = $region33
    $region32: #{tpu_custom_call.1} parent=1 // pred_region
      _
    $region33: #{tpu_custom_call.1} parent=1 // pred_fallthru
      _
    // Predicated region
    $region34: #{tpu_custom_call.1} parent=1 // pred_check
      _
    $region35: #{tpu_custom_call.1} parent=1 // pred_check_branch
      %53 = sbr.rel (0) target = $region37
    $region36: #{tpu_custom_call.1} parent=1 // pred_region
      %54 = dma.done [#allocation3], 3072
    $region37: #{tpu_custom_call.1} parent=1 // pred_fallthru
      _
    // Predicated region
    $region38: #{tpu_custom_call.1} parent=1 // pred_check
      _
    $region39: #{tpu_custom_call.1} parent=1 // pred_check_branch
      %56 = sbr.rel (0) target = $region41
    $region40: #{tpu_custom_call.1} parent=1 // pred_region
      %57 = dma.done [#allocation6], 3072
    $region41: #{tpu_custom_call.1} parent=1 // pred_fallthru
      _
    %v59 = vld [vmem:[%s0] sm:$0xf]
    %v60 = vld [vmem:[%s0 + $0x4] sm:$0xf]
    %v61 = vld [vmem:[%s0 + $0x8] sm:$0xf]
    %v62 = vld [vmem:[%s0 + $0xc] sm:$0xf]
    %v63 = vld [vmem:[%s0 + $0x10] sm:$0xf]
    %v64 = vld [vmem:[%s0 + $0x14] sm:$0xf]
    %v65 = vld [vmem:[%s0 + $0x18] sm:$0xf]
    %v66 = vld [vmem:[%s0 + $0x1c] sm:$0xf]
    %v67 = vld [vmem:[%s1] sm:$0xf]
    %v68 = vld [vmem:[%s1 + $0x4] sm:$0xf]
    %v69 = vld [vmem:[%s1 + $0x8] sm:$0xf]
    %v70 = vld [vmem:[%s1 + $0xc] sm:$0xf]
    %v71 = vld [vmem:[%s1 + $0x10] sm:$0xf]
    %v72 = vld [vmem:[%s1 + $0x14] sm:$0xf]
    %v73 = vld [vmem:[%s1 + $0x18] sm:$0xf]
    %v74 = vld [vmem:[%s1 + $0x1c] sm:$0xf]
    %v75 = vld [vmem:[%s1 + $0x20] sm:$0xf]
    %v76 = vld [vmem:[%s1 + $0x24] sm:$0xf]
    %v77 = vld [vmem:[%s1 + $0x28] sm:$0xf]
    %v78 = vld [vmem:[%s1 + $0x2c] sm:$0xf]
    %v79 = vld [vmem:[%s1 + $0x30] sm:$0xf]
    %v80 = vld [vmem:[%s1 + $0x34] sm:$0xf]
    %v81 = vld [vmem:[%s1 + $0x38] sm:$0xf]
    %v82 = vld [vmem:[%s1 + $0x3c] sm:$0xf]
    %v83 = vld [vmem:[%s1 + $0x40] sm:$0xf]
    %v84 = vld [vmem:[%s1 + $0x44] sm:$0xf]
    %v85 = vld [vmem:[%s1 + $0x48] sm:$0xf]
    %v86 = vld [vmem:[%s1 + $0x4c] sm:$0xf]
    %v87 = vld [vmem:[%s1 + $0x50] sm:$0xf]
    %v88 = vld [vmem:[%s1 + $0x54] sm:$0xf]
    %v89 = vld [vmem:[%s1 + $0x58] sm:$0xf]
    %v90 = vld [vmem:[%s1 + $0x5c] sm:$0xf]
    %v115 = vunpack.c.l.b16 %v67
    %v116 = vunpack.c.l.b16 %v68
    %v117 = vunpack.c.l.b16 %v69
    %v118 = vunpack.c.l.b16 %v70
    %v119 = vunpack.c.l.b16 %v71
    %v120 = vunpack.c.l.b16 %v72
    %v121 = vunpack.c.l.b16 %v73
    %v122 = vunpack.c.l.b16 %v74
    %v123 = vunpack.c.l.b16 %v75
    %v124 = vunpack.c.l.b16 %v76
    %v125 = vunpack.c.l.b16 %v77
    %v126 = vunpack.c.l.b16 %v78
    %v127 = vunpack.c.l.b16 %v79
    %v128 = vunpack.c.l.b16 %v80
    %v129 = vunpack.c.l.b16 %v81
    %v130 = vunpack.c.l.b16 %v82
    %v131 = vunpack.c.l.b16 %v83
    %v132 = vunpack.c.l.b16 %v84
    %v133 = vunpack.c.l.b16 %v85
    %v134 = vunpack.c.l.b16 %v86
    %v135 = vunpack.c.l.b16 %v87
    %v136 = vunpack.c.l.b16 %v88
    %v137 = vunpack.c.l.b16 %v89
    %v138 = vunpack.c.l.b16 %v90
    %v139 = vpack.c.b16 %v116, %v115
    %v140 = vpack.c.b16 %v118, %v117
    %v141 = vpack.c.b16 %v120, %v119
    %v142 = vpack.c.b16 %v122, %v121
    %v143 = vpack.c.b16 %v124, %v123
    %v144 = vpack.c.b16 %v126, %v125
    %v145 = vpack.c.b16 %v128, %v127
    %v146 = vpack.c.b16 %v130, %v129
    %v147 = vpack.c.b16 %v132, %v131
    %v148 = vpack.c.b16 %v134, %v133
    %v149 = vpack.c.b16 %v136, %v135
    %v150 = vpack.c.b16 %v138, %v137
    %v159 = vunpack.c.l.b16 %v59
    %v160 = vunpack.c.l.b16 %v60
    %v161 = vunpack.c.l.b16 %v61
    %v162 = vunpack.c.l.b16 %v62
    %v163 = vunpack.c.l.b16 %v63
    %v164 = vunpack.c.l.b16 %v64
    %v165 = vunpack.c.l.b16 %v65
    %v166 = vunpack.c.l.b16 %v66
    %v167 = vpack.c.b16 %v160, %v159
    %v168 = vpack.c.b16 %v162, %v161
    %v169 = vpack.c.b16 %v164, %v163
    %v170 = vpack.c.b16 %v166, %v165
    %vm175 = vcmask 523264
    %v177 = vsel %vm175, %v139, 0
    %v180 = vsel %vm175, %v140, 0
    %v183 = vsel %vm175, %v141, 0
    %v186 = vsel %vm175, %v142, 0
    %v189 = vsel %vm175, %v143, 0
    %v192 = vsel %vm175, %v144, 0
    %v195 = vsel %vm175, %v145, 0
    %v198 = vsel %vm175, %v146, 0
    %v201 = vsel %vm175, %v147, 0
    %v204 = vsel %vm175, %v148, 0
    %v207 = vsel %vm175, %v149, 0
    %v210 = vsel %vm175, %v150, 0
    %212 = vmatprep.subr.bf16.mxu0 0
    %213 = vmatpush1.bf16.msra.mxu0 0
    %214 = vmatprep.subr.bf16.mxu0 0
    %215 = vmatpush1.bf16.msra.mxu0 0
    %216 = vmatprep.subr.bf16.mxu0 0
    %217 = vmatpush1.bf16.msra.mxu0 0
    %218 = vmatprep.subr.bf16.mxu0 0
    %219 = vmatpush1.bf16.msra.mxu0 0
    %220 = vmatprep.subr.bf16.mxu0 0
    %221 = vmatpush1.bf16.msra.mxu0 %v170
    %222 = vmatprep.subr.bf16.mxu0 0
    %223 = vmatpush1.bf16.msra.mxu0 %v169
    %224 = vmatprep.subr.bf16.mxu0 0
    %225 = vmatpush1.bf16.msra.mxu0 %v168
    %226 = vmatprep.subr.bf16.mxu0 0
    %227 = vmatpush1.bf16.msra.mxu0 %v167
    %228 = vmatprep.subr.bf16.mxu0 0
    %229 = vmatpush2.bf16.msra.mxu0 0
    %230 = vmatprep.subr.bf16.mxu0 0
    %231 = vmatpush2.bf16.msra.mxu0 0
    %232 = vmatprep.subr.bf16.mxu0 0
    %233 = vmatpush2.bf16.msra.mxu0 0
    %234 = vmatprep.subr.bf16.mxu0 0
    %235 = vmatpush2.bf16.msra.mxu0 0
    %236 = vmatprep.subr.bf16.mxu0 0
    %237 = vmatpush2.bf16.msra.mxu0 0
    %238 = vmatprep.subr.bf16.mxu0 0
    %239 = vmatpush2.bf16.msra.mxu0 0
    %240 = vmatprep.subr.bf16.mxu0 0
    %241 = vmatpush2.bf16.msra.mxu0 0
    %242 = vmatprep.subr.bf16.mxu0 0
    %243 = vmatpush2.bf16.msra.mxu0 0
    %244 = vmatprep.mubr.bf16.mxu0 0
    %245 = vmatmul.mubr.bf16.gmra.mxu0 %v177
    %v246 = vpop.f32.mrf.mxu0
    %v247 = vadd.f32 0.0, %v246
    %v248 = vpop.f32.mrf.mxu0
    %v249 = vpop.f32.mrf.mxu0
    %v250 = vadd.f32 0.0, %v249
    %v251 = vpop.f32.mrf.mxu0
    %252 = vmatprep.mubr.bf16.mxu0 0
    %253 = vmatmul.mubr.bf16.gmra.mxu0 %v180
    %v254 = vpop.f32.mrf.mxu0
    %v255 = vadd.f32 0.0, %v254
    %v256 = vpop.f32.mrf.mxu0
    %v257 = vpop.f32.mrf.mxu0
    %v258 = vadd.f32 0.0, %v257
    %v259 = vpop.f32.mrf.mxu0
    %260 = vmatprep.mubr.bf16.mxu0 0
    %261 = vmatmul.mubr.bf16.gmra.mxu0 %v183
    %v262 = vpop.f32.mrf.mxu0
    %v263 = vadd.f32 0.0, %v262
    %v264 = vpop.f32.mrf.mxu0
    %v265 = vpop.f32.mrf.mxu0
    %v266 = vadd.f32 0.0, %v265
    %v267 = vpop.f32.mrf.mxu0
    %268 = vmatprep.mubr.bf16.mxu0 0
    %269 = vmatmul.mubr.bf16.gmra.mxu0 %v186
    %v270 = vpop.f32.mrf.mxu0
    %v271 = vadd.f32 0.0, %v270
    %v272 = vpop.f32.mrf.mxu0
    %v273 = vpop.f32.mrf.mxu0
    %v274 = vadd.f32 0.0, %v273
    %v275 = vpop.f32.mrf.mxu0
    %276 = vmatprep.mubr.bf16.mxu0 0
    %277 = vmatmul.mubr.bf16.gmra.mxu0 %v189
    %v278 = vpop.f32.mrf.mxu0
    %v279 = vadd.f32 0.0, %v278
    %v280 = vpop.f32.mrf.mxu0
    %v281 = vpop.f32.mrf.mxu0
    %v282 = vadd.f32 0.0, %v281
    %v283 = vpop.f32.mrf.mxu0
    %284 = vmatprep.mubr.bf16.mxu0 0
    %285 = vmatmul.mubr.bf16.gmra.mxu0 %v192
    %v286 = vpop.f32.mrf.mxu0
    %v287 = vadd.f32 0.0, %v286
    %v288 = vpop.f32.mrf.mxu0
    %v289 = vpop.f32.mrf.mxu0
    %v290 = vadd.f32 0.0, %v289
    %v291 = vpop.f32.mrf.mxu0
    %292 = vmatprep.mubr.bf16.mxu0 0
    %293 = vmatmul.mubr.bf16.gmra.mxu0 %v195
    %v294 = vpop.f32.mrf.mxu0
    %v295 = vadd.f32 0.0, %v294
    %v296 = vpop.f32.mrf.mxu0
    %v297 = vpop.f32.mrf.mxu0
    %v298 = vadd.f32 0.0, %v297
    %v299 = vpop.f32.mrf.mxu0
    %300 = vmatprep.mubr.bf16.mxu0 0
    %301 = vmatmul.mubr.bf16.gmra.mxu0 %v198
    %v302 = vpop.f32.mrf.mxu0
    %v303 = vadd.f32 0.0, %v302
    %v304 = vpop.f32.mrf.mxu0
    %v305 = vpop.f32.mrf.mxu0
    %v306 = vadd.f32 0.0, %v305
    %v307 = vpop.f32.mrf.mxu0
    %308 = vmatprep.mubr.bf16.mxu0 0
    %309 = vmatmul.mubr.bf16.gmra.mxu0 %v201
    %v310 = vpop.f32.mrf.mxu0
    %v311 = vadd.f32 0.0, %v310
    %v312 = vpop.f32.mrf.mxu0
    %v313 = vpop.f32.mrf.mxu0
    %v314 = vadd.f32 0.0, %v313
    %v315 = vpop.f32.mrf.mxu0
    %316 = vmatprep.mubr.bf16.mxu0 0
    %317 = vmatmul.mubr.bf16.gmra.mxu0 %v204
    %v318 = vpop.f32.mrf.mxu0
    %v319 = vadd.f32 0.0, %v318
    %v320 = vpop.f32.mrf.mxu0
    %v321 = vpop.f32.mrf.mxu0
    %v322 = vadd.f32 0.0, %v321
    %v323 = vpop.f32.mrf.mxu0
    %324 = vmatprep.mubr.bf16.mxu0 0
    %325 = vmatmul.mubr.bf16.gmra.mxu0 %v207
    %v326 = vpop.f32.mrf.mxu0
    %v327 = vadd.f32 0.0, %v326
    %v328 = vpop.f32.mrf.mxu0
    %v329 = vpop.f32.mrf.mxu0
    %v330 = vadd.f32 0.0, %v329
    %v331 = vpop.f32.mrf.mxu0
    %332 = vmatprep.mubr.bf16.mxu0 0
    %333 = vmatmul.mubr.bf16.gmra.mxu0 %v210
    %v334 = vpop.f32.mrf.mxu0
    %v335 = vadd.f32 0.0, %v334
    %v336 = vpop.f32.mrf.mxu0
    %v337 = vpop.f32.mrf.mxu0
    %v338 = vadd.f32 0.0, %v337
    %v339 = vpop.f32.mrf.mxu0
    %340 = vdwg.mxu0
    %v341 = vpack.c.bf16 %v250, %v247
    %v342 = vpack.c.bf16 %v258, %v255
    %v343 = vpack.c.bf16 %v266, %v263
    %v344 = vpack.c.bf16 %v274, %v271
    %v345 = vpack.c.bf16 %v282, %v279
    %v346 = vpack.c.bf16 %v290, %v287
    %v347 = vpack.c.bf16 %v298, %v295
    %v348 = vpack.c.bf16 %v306, %v303
    %v349 = vpack.c.bf16 %v314, %v311
    %v350 = vpack.c.bf16 %v322, %v319
    %v351 = vpack.c.bf16 %v330, %v327
    %v352 = vpack.c.bf16 %v338, %v335
    %v353 = vld [vmem:[%s3] sm:$0xf]
    %v354 = vld [vmem:[%s3 + $0x4] sm:$0xf]
    %v355 = vld [vmem:[%s3 + $0x8] sm:$0xf]
    %v356 = vld [vmem:[%s3 + $0xc] sm:$0xf]
    %v357 = vld [vmem:[%s3 + $0x10] sm:$0xf]
    %v358 = vld [vmem:[%s3 + $0x14] sm:$0xf]
    %v359 = vld [vmem:[%s3 + $0x18] sm:$0xf]
    %v360 = vld [vmem:[%s3 + $0x1c] sm:$0xf]
    %v361 = vld [vmem:[%s3 + $0x20] sm:$0xf]
    %v362 = vld [vmem:[%s3 + $0x24] sm:$0xf]
    %v363 = vld [vmem:[%s3 + $0x28] sm:$0xf]
    %v364 = vld [vmem:[%s3 + $0x2c] sm:$0xf]
    %v365 = vld [vmem:[%s3 + $0x30] sm:$0xf]
    %v366 = vld [vmem:[%s3 + $0x34] sm:$0xf]
    %v367 = vld [vmem:[%s3 + $0x38] sm:$0xf]
    %v368 = vld [vmem:[%s3 + $0x3c] sm:$0xf]
    %v369 = vld [vmem:[%s4] sm:$0x1]
    %v371 = vlaneseq
    %v372 = vshrl.u32 %v371, 7
    %v373 = vsub.s32 0, %v372
    %v374 = vrot.slane %v369, %v373
    %v392 = vunpack.c.l.b16 %v353
    %v393 = vunpack.c.l.b16 %v354
    %v394 = vunpack.c.l.b16 %v355
    %v395 = vunpack.c.l.b16 %v356
    %v396 = vunpack.c.l.b16 %v357
    %v397 = vunpack.c.l.b16 %v358
    %v398 = vunpack.c.l.b16 %v359
    %v399 = vunpack.c.l.b16 %v360
    %v400 = vunpack.c.l.b16 %v361
    %v401 = vunpack.c.l.b16 %v362
    %v402 = vunpack.c.l.b16 %v363
    %v403 = vunpack.c.l.b16 %v364
    %v404 = vunpack.c.l.b16 %v365
    %v405 = vunpack.c.l.b16 %v366
    %v406 = vunpack.c.l.b16 %v367
    %v407 = vunpack.c.l.b16 %v368
    %v408 = vpack.c.b16 %v393, %v392
    %v409 = vpack.c.b16 %v395, %v394
    %v410 = vpack.c.b16 %v397, %v396
    %v411 = vpack.c.b16 %v399, %v398
    %v412 = vpack.c.b16 %v401, %v400
    %v413 = vpack.c.b16 %v403, %v402
    %v414 = vpack.c.b16 %v405, %v404
    %v415 = vpack.c.b16 %v407, %v406
    %424 = vmatprep.subr.bf16.mxu0 0
    %425 = vmatpush1.bf16.msra.mxu0 %v415
    %426 = vmatprep.subr.bf16.mxu0 0
    %427 = vmatpush1.bf16.msra.mxu0 %v414
    %428 = vmatprep.subr.bf16.mxu0 0
    %429 = vmatpush1.bf16.msra.mxu0 %v413
    %430 = vmatprep.subr.bf16.mxu0 0
    %431 = vmatpush1.bf16.msra.mxu0 %v412
    %432 = vmatprep.subr.bf16.mxu0 0
    %433 = vmatpush1.bf16.msra.mxu0 %v411
    %434 = vmatprep.subr.bf16.mxu0 0
    %435 = vmatpush1.bf16.msra.mxu0 %v410
    %436 = vmatprep.subr.bf16.mxu0 0
    %437 = vmatpush1.bf16.msra.mxu0 %v409
    %438 = vmatprep.subr.bf16.mxu0 0
    %439 = vmatpush1.bf16.msra.mxu0 %v408
    %440 = vmatprep.subr.bf16.mxu0 0
    %441 = vmatpush2.bf16.msra.mxu0 0
    %442 = vmatprep.subr.bf16.mxu0 0
    %443 = vmatpush2.bf16.msra.mxu0 0
    %444 = vmatprep.subr.bf16.mxu0 0
    %445 = vmatpush2.bf16.msra.mxu0 0
    %446 = vmatprep.subr.bf16.mxu0 0
    %447 = vmatpush2.bf16.msra.mxu0 0
    %448 = vmatprep.subr.bf16.mxu0 0
    %449 = vmatpush2.bf16.msra.mxu0 0
    %450 = vmatprep.subr.bf16.mxu0 0
    %451 = vmatpush2.bf16.msra.mxu0 0
    %452 = vmatprep.subr.bf16.mxu0 0
    %453 = vmatpush2.bf16.msra.mxu0 0
    %454 = vmatprep.subr.bf16.mxu0 0
    %455 = vmatpush2.bf16.msra.mxu0 0
    %456 = vmatprep.mubr.bf16.mxu0 0
    %457 = vmatmul.mubr.bf16.gmra.mxu0 %v167
    %v458 = vpop.f32.mrf.mxu0
    %v459 = vadd.f32 %v374, %v458
    %v460 = vpop.f32.mrf.mxu0
    %v461 = vpop.f32.mrf.mxu0
    %v462 = vadd.f32 %v374, %v461
    %v463 = vpop.f32.mrf.mxu0
    %464 = vmatprep.mubr.bf16.mxu0 0
    %465 = vmatmul.mubr.bf16.gmra.mxu0 %v168
    %v466 = vpop.f32.mrf.mxu0
    %v467 = vadd.f32 %v374, %v466
    %v468 = vpop.f32.mrf.mxu0
    %v469 = vpop.f32.mrf.mxu0
    %v470 = vadd.f32 %v374, %v469
    %v471 = vpop.f32.mrf.mxu0
    %472 = vmatprep.mubr.bf16.mxu0 0
    %473 = vmatmul.mubr.bf16.gmra.mxu0 %v169
    %v474 = vpop.f32.mrf.mxu0
    %v475 = vadd.f32 %v374, %v474
    %v476 = vpop.f32.mrf.mxu0
    %v477 = vpop.f32.mrf.mxu0
    %v478 = vadd.f32 %v374, %v477
    %v479 = vpop.f32.mrf.mxu0
    %480 = vmatprep.mubr.bf16.mxu0 0
    %481 = vmatmul.mubr.bf16.gmra.mxu0 %v170
    %v482 = vpop.f32.mrf.mxu0
    %v483 = vadd.f32 %v374, %v482
    %v484 = vpop.f32.mrf.mxu0
    %v485 = vpop.f32.mrf.mxu0
    %v486 = vadd.f32 %v374, %v485
    %v487 = vpop.f32.mrf.mxu0
    %488 = vdwg.mxu0
    %v489 = vld [vmem:[#allocation2] sm:$0xf]
    %v490 = vld [vmem:[#allocation2 + $0x4] sm:$0xf]
    %v491 = vld [vmem:[#allocation2 + $0x8] sm:$0xf]
    %v492 = vld [vmem:[#allocation2 + $0xc] sm:$0xf]
    %v493 = vld [vmem:[#allocation2 + $0x10] sm:$0xf]
    %v494 = vld [vmem:[#allocation2 + $0x14] sm:$0xf]
    %v495 = vld [vmem:[#allocation2 + $0x18] sm:$0xf]
    %v496 = vld [vmem:[#allocation2 + $0x1c] sm:$0xf]
    %v497 = vld [vmem:[#allocation2 + $0x20] sm:$0xf]
    %v498 = vld [vmem:[#allocation2 + $0x24] sm:$0xf]
    %v499 = vld [vmem:[#allocation2 + $0x28] sm:$0xf]
    %v500 = vld [vmem:[#allocation2 + $0x2c] sm:$0xf]
    %v501 = vld [vmem:[#allocation2 + $0x30] sm:$0xf]
    %v502 = vld [vmem:[#allocation2 + $0x34] sm:$0xf]
    %v503 = vld [vmem:[#allocation2 + $0x38] sm:$0xf]
    %v504 = vld [vmem:[#allocation2 + $0x3c] sm:$0xf]
    %v521 = vunpack.c.l.b16 %v489
    %v522 = vunpack.c.l.b16 %v490
    %v523 = vunpack.c.l.b16 %v491
    %v524 = vunpack.c.l.b16 %v492
    %v525 = vunpack.c.l.b16 %v493
    %v526 = vunpack.c.l.b16 %v494
    %v527 = vunpack.c.l.b16 %v495
    %v528 = vunpack.c.l.b16 %v496
    %v529 = vunpack.c.l.b16 %v497
    %v530 = vunpack.c.l.b16 %v498
    %v531 = vunpack.c.l.b16 %v499
    %v532 = vunpack.c.l.b16 %v500
    %v533 = vunpack.c.l.b16 %v501
    %v534 = vunpack.c.l.b16 %v502
    %v535 = vunpack.c.l.b16 %v503
    %v536 = vunpack.c.l.b16 %v504
    %v537 = vpack.c.b16 %v522, %v521
    %v538 = vpack.c.b16 %v524, %v523
    %v539 = vpack.c.b16 %v526, %v525
    %v540 = vpack.c.b16 %v528, %v527
    %v541 = vpack.c.b16 %v530, %v529
    %v542 = vpack.c.b16 %v532, %v531
    %v543 = vpack.c.b16 %v534, %v533
    %v544 = vpack.c.b16 %v536, %v535
    %553 = vmatprep.subr.bf16.mxu0 0
    %554 = vmatpush1.bf16.msra.mxu0 %v544
    %555 = vmatprep.subr.bf16.mxu0 0
    %556 = vmatpush1.bf16.msra.mxu0 %v543
    %557 = vmatprep.subr.bf16.mxu0 0
    %558 = vmatpush1.bf16.msra.mxu0 %v542
    %559 = vmatprep.subr.bf16.mxu0 0
    %560 = vmatpush1.bf16.msra.mxu0 %v541
    %561 = vmatprep.subr.bf16.mxu0 0
    %562 = vmatpush1.bf16.msra.mxu0 %v540
    %563 = vmatprep.subr.bf16.mxu0 0
    %564 = vmatpush1.bf16.msra.mxu0 %v539
    %565 = vmatprep.subr.bf16.mxu0 0
    %566 = vmatpush1.bf16.msra.mxu0 %v538
    %567 = vmatprep.subr.bf16.mxu0 0
    %568 = vmatpush1.bf16.msra.mxu0 %v537
    %569 = vmatprep.subr.bf16.mxu0 0
    %570 = vmatpush2.bf16.msra.mxu0 0
    %571 = vmatprep.subr.bf16.mxu0 0
    %572 = vmatpush2.bf16.msra.mxu0 0
    %573 = vmatprep.subr.bf16.mxu0 0
    %574 = vmatpush2.bf16.msra.mxu0 0
    %575 = vmatprep.subr.bf16.mxu0 0
    %576 = vmatpush2.bf16.msra.mxu0 0
    %577 = vmatprep.subr.bf16.mxu0 0
    %578 = vmatpush2.bf16.msra.mxu0 0
    %579 = vmatprep.subr.bf16.mxu0 0
    %580 = vmatpush2.bf16.msra.mxu0 0
    %581 = vmatprep.subr.bf16.mxu0 0
    %582 = vmatpush2.bf16.msra.mxu0 0
    %583 = vmatprep.subr.bf16.mxu0 0
    %584 = vmatpush2.bf16.msra.mxu0 0
    %585 = vmatprep.mubr.bf16.mxu0 0
    %586 = vmatmul.mubr.bf16.gmra.mxu0 %v341
    %v587 = vpop.f32.mrf.mxu0
    %v588 = vadd.f32 0.0, %v587
    %v589 = vpop.f32.mrf.mxu0
    %v590 = vpop.f32.mrf.mxu0
    %v591 = vadd.f32 0.0, %v590
    %v592 = vpop.f32.mrf.mxu0
    %593 = vmatprep.mubr.bf16.mxu0 0
    %594 = vmatmul.mubr.bf16.gmra.mxu0 %v342
    %v595 = vpop.f32.mrf.mxu0
    %v596 = vadd.f32 0.0, %v595
    %v597 = vpop.f32.mrf.mxu0
    %v598 = vpop.f32.mrf.mxu0
    %v599 = vadd.f32 0.0, %v598
    %v600 = vpop.f32.mrf.mxu0
    %601 = vmatprep.mubr.bf16.mxu0 0
    %602 = vmatmul.mubr.bf16.gmra.mxu0 %v343
    %v603 = vpop.f32.mrf.mxu0
    %v604 = vadd.f32 0.0, %v603
    %v605 = vpop.f32.mrf.mxu0
    %v606 = vpop.f32.mrf.mxu0
    %v607 = vadd.f32 0.0, %v606
    %v608 = vpop.f32.mrf.mxu0
    %609 = vmatprep.mubr.bf16.mxu0 0
    %610 = vmatmul.mubr.bf16.gmra.mxu0 %v344
    %v611 = vpop.f32.mrf.mxu0
    %v612 = vadd.f32 0.0, %v611
    %v613 = vpop.f32.mrf.mxu0
    %v614 = vpop.f32.mrf.mxu0
    %v615 = vadd.f32 0.0, %v614
    %v616 = vpop.f32.mrf.mxu0
    %617 = vdwg.mxu0
    %v618 = vadd.f32 %v459, %v588
    %v619 = vadd.f32 %v462, %v591
    %v620 = vadd.f32 %v467, %v596
    %v621 = vadd.f32 %v470, %v599
    %v622 = vadd.f32 %v475, %v604
    %v623 = vadd.f32 %v478, %v607
    %v624 = vadd.f32 %v483, %v612
    %v625 = vadd.f32 %v486, %v615
    %v626 = vld [vmem:[#allocation2 + $0x40] sm:$0xf]
    %v627 = vld [vmem:[#allocation2 + $0x44] sm:$0xf]
    %v628 = vld [vmem:[#allocation2 + $0x48] sm:$0xf]
    %v629 = vld [vmem:[#allocation2 + $0x4c] sm:$0xf]
    %v630 = vld [vmem:[#allocation2 + $0x50] sm:$0xf]
    %v631 = vld [vmem:[#allocation2 + $0x54] sm:$0xf]
    %v632 = vld [vmem:[#allocation2 + $0x58] sm:$0xf]
    %v633 = vld [vmem:[#allocation2 + $0x5c] sm:$0xf]
    %v634 = vld [vmem:[#allocation2 + $0x60] sm:$0xf]
    %v635 = vld [vmem:[#allocation2 + $0x64] sm:$0xf]
    %v636 = vld [vmem:[#allocation2 + $0x68] sm:$0xf]
    %v637 = vld [vmem:[#allocation2 + $0x6c] sm:$0xf]
    %v638 = vld [vmem:[#allocation2 + $0x70] sm:$0xf]
    %v639 = vld [vmem:[#allocation2 + $0x74] sm:$0xf]
    %v640 = vld [vmem:[#allocation2 + $0x78] sm:$0xf]
    %v641 = vld [vmem:[#allocation2 + $0x7c] sm:$0xf]
    %v658 = vunpack.c.l.b16 %v626
    %v659 = vunpack.c.l.b16 %v627
    %v660 = vunpack.c.l.b16 %v628
    %v661 = vunpack.c.l.b16 %v629
    %v662 = vunpack.c.l.b16 %v630
    %v663 = vunpack.c.l.b16 %v631
    %v664 = vunpack.c.l.b16 %v632
    %v665 = vunpack.c.l.b16 %v633
    %v666 = vunpack.c.l.b16 %v634
    %v667 = vunpack.c.l.b16 %v635
    %v668 = vunpack.c.l.b16 %v636
    %v669 = vunpack.c.l.b16 %v637
    %v670 = vunpack.c.l.b16 %v638
    %v671 = vunpack.c.l.b16 %v639
    %v672 = vunpack.c.l.b16 %v640
    %v673 = vunpack.c.l.b16 %v641
    %v674 = vpack.c.b16 %v659, %v658
    %v675 = vpack.c.b16 %v661, %v660
    %v676 = vpack.c.b16 %v663, %v662
    %v677 = vpack.c.b16 %v665, %v664
    %v678 = vpack.c.b16 %v667, %v666
    %v679 = vpack.c.b16 %v669, %v668
    %v680 = vpack.c.b16 %v671, %v670
    %v681 = vpack.c.b16 %v673, %v672
    %690 = vmatprep.subr.bf16.mxu0 0
    %691 = vmatpush1.bf16.msra.mxu0 %v681
    %692 = vmatprep.subr.bf16.mxu0 0
    %693 = vmatpush1.bf16.msra.mxu0 %v680
    %694 = vmatprep.subr.bf16.mxu0 0
    %695 = vmatpush1.bf16.msra.mxu0 %v679
    %696 = vmatprep.subr.bf16.mxu0 0
    %697 = vmatpush1.bf16.msra.mxu0 %v678
    %698 = vmatprep.subr.bf16.mxu0 0
    %699 = vmatpush1.bf16.msra.mxu0 %v677
    %700 = vmatprep.subr.bf16.mxu0 0
    %701 = vmatpush1.bf16.msra.mxu0 %v676
    %702 = vmatprep.subr.bf16.mxu0 0
    %703 = vmatpush1.bf16.msra.mxu0 %v675
    %704 = vmatprep.subr.bf16.mxu0 0
    %705 = vmatpush1.bf16.msra.mxu0 %v674
    %706 = vmatprep.subr.bf16.mxu0 0
    %707 = vmatpush2.bf16.msra.mxu0 0
    %708 = vmatprep.subr.bf16.mxu0 0
    %709 = vmatpush2.bf16.msra.mxu0 0
    %710 = vmatprep.subr.bf16.mxu0 0
    %711 = vmatpush2.bf16.msra.mxu0 0
    %712 = vmatprep.subr.bf16.mxu0 0
    %713 = vmatpush2.bf16.msra.mxu0 0
    %714 = vmatprep.subr.bf16.mxu0 0
    %715 = vmatpush2.bf16.msra.mxu0 0
    %716 = vmatprep.subr.bf16.mxu0 0
    %717 = vmatpush2.bf16.msra.mxu0 0
    %718 = vmatprep.subr.bf16.mxu0 0
    %719 = vmatpush2.bf16.msra.mxu0 0
    %720 = vmatprep.subr.bf16.mxu0 0
    %721 = vmatpush2.bf16.msra.mxu0 0
    %722 = vmatprep.mubr.bf16.mxu0 0
    %723 = vmatmul.mubr.bf16.gmra.mxu0 %v345
    %v724 = vpop.f32.mrf.mxu0
    %v725 = vadd.f32 0.0, %v724
    %v726 = vpop.f32.mrf.mxu0
    %v727 = vpop.f32.mrf.mxu0
    %v728 = vadd.f32 0.0, %v727
    %v729 = vpop.f32.mrf.mxu0
    %730 = vmatprep.mubr.bf16.mxu0 0
    %731 = vmatmul.mubr.bf16.gmra.mxu0 %v346
    %v732 = vpop.f32.mrf.mxu0
    %v733 = vadd.f32 0.0, %v732
    %v734 = vpop.f32.mrf.mxu0
    %v735 = vpop.f32.mrf.mxu0
    %v736 = vadd.f32 0.0, %v735
    %v737 = vpop.f32.mrf.mxu0
    %738 = vmatprep.mubr.bf16.mxu0 0
    %739 = vmatmul.mubr.bf16.gmra.mxu0 %v347
    %v740 = vpop.f32.mrf.mxu0
    %v741 = vadd.f32 0.0, %v740
    %v742 = vpop.f32.mrf.mxu0
    %v743 = vpop.f32.mrf.mxu0
    %v744 = vadd.f32 0.0, %v743
    %v745 = vpop.f32.mrf.mxu0
    %746 = vmatprep.mubr.bf16.mxu0 0
    %747 = vmatmul.mubr.bf16.gmra.mxu0 %v348
    %v748 = vpop.f32.mrf.mxu0
    %v749 = vadd.f32 0.0, %v748
    %v750 = vpop.f32.mrf.mxu0
    %v751 = vpop.f32.mrf.mxu0
    %v752 = vadd.f32 0.0, %v751
    %v753 = vpop.f32.mrf.mxu0
    %754 = vdwg.mxu0
    %v755 = vadd.f32 %v618, %v725
    %v756 = vadd.f32 %v619, %v728
    %v757 = vadd.f32 %v620, %v733
    %v758 = vadd.f32 %v621, %v736
    %v759 = vadd.f32 %v622, %v741
    %v760 = vadd.f32 %v623, %v744
    %v761 = vadd.f32 %v624, %v749
    %v762 = vadd.f32 %v625, %v752
    %v763 = vld [vmem:[#allocation2 + $0x80] sm:$0xf]
    %v764 = vld [vmem:[#allocation2 + $0x84] sm:$0xf]
    %v765 = vld [vmem:[#allocation2 + $0x88] sm:$0xf]
    %v766 = vld [vmem:[#allocation2 + $0x8c] sm:$0xf]
    %v767 = vld [vmem:[#allocation2 + $0x90] sm:$0xf]
    %v768 = vld [vmem:[#allocation2 + $0x94] sm:$0xf]
    %v769 = vld [vmem:[#allocation2 + $0x98] sm:$0xf]
    %v770 = vld [vmem:[#allocation2 + $0x9c] sm:$0xf]
    %v771 = vld [vmem:[#allocation2 + $0xa0] sm:$0xf]
    %v772 = vld [vmem:[#allocation2 + $0xa4] sm:$0xf]
    %v773 = vld [vmem:[#allocation2 + $0xa8] sm:$0xf]
    %v774 = vld [vmem:[#allocation2 + $0xac] sm:$0xf]
    %v775 = vld [vmem:[#allocation2 + $0xb0] sm:$0xf]
    %v776 = vld [vmem:[#allocation2 + $0xb4] sm:$0xf]
    %v777 = vld [vmem:[#allocation2 + $0xb8] sm:$0xf]
    %v778 = vld [vmem:[#allocation2 + $0xbc] sm:$0xf]
    %v795 = vunpack.c.l.b16 %v763
    %v796 = vunpack.c.l.b16 %v764
    %v797 = vunpack.c.l.b16 %v765
    %v798 = vunpack.c.l.b16 %v766
    %v799 = vunpack.c.l.b16 %v767
    %v800 = vunpack.c.l.b16 %v768
    %v801 = vunpack.c.l.b16 %v769
    %v802 = vunpack.c.l.b16 %v770
    %v803 = vunpack.c.l.b16 %v771
    %v804 = vunpack.c.l.b16 %v772
    %v805 = vunpack.c.l.b16 %v773
    %v806 = vunpack.c.l.b16 %v774
    %v807 = vunpack.c.l.b16 %v775
    %v808 = vunpack.c.l.b16 %v776
    %v809 = vunpack.c.l.b16 %v777
    %v810 = vunpack.c.l.b16 %v778
    %v811 = vpack.c.b16 %v796, %v795
    %v812 = vpack.c.b16 %v798, %v797
    %v813 = vpack.c.b16 %v800, %v799
    %v814 = vpack.c.b16 %v802, %v801
    %v815 = vpack.c.b16 %v804, %v803
    %v816 = vpack.c.b16 %v806, %v805
    %v817 = vpack.c.b16 %v808, %v807
    %v818 = vpack.c.b16 %v810, %v809
    %827 = vmatprep.subr.bf16.mxu0 0
    %828 = vmatpush1.bf16.msra.mxu0 %v818
    %829 = vmatprep.subr.bf16.mxu0 0
    %830 = vmatpush1.bf16.msra.mxu0 %v817
    %831 = vmatprep.subr.bf16.mxu0 0
    %832 = vmatpush1.bf16.msra.mxu0 %v816
    %833 = vmatprep.subr.bf16.mxu0 0
    %834 = vmatpush1.bf16.msra.mxu0 %v815
    %835 = vmatprep.subr.bf16.mxu0 0
    %836 = vmatpush1.bf16.msra.mxu0 %v814
    %837 = vmatprep.subr.bf16.mxu0 0
    %838 = vmatpush1.bf16.msra.mxu0 %v813
    %839 = vmatprep.subr.bf16.mxu0 0
    %840 = vmatpush1.bf16.msra.mxu0 %v812
    %841 = vmatprep.subr.bf16.mxu0 0
    %842 = vmatpush1.bf16.msra.mxu0 %v811
    %843 = vmatprep.subr.bf16.mxu0 0
    %844 = vmatpush2.bf16.msra.mxu0 0
    %845 = vmatprep.subr.bf16.mxu0 0
    %846 = vmatpush2.bf16.msra.mxu0 0
    %847 = vmatprep.subr.bf16.mxu0 0
    %848 = vmatpush2.bf16.msra.mxu0 0
    %849 = vmatprep.subr.bf16.mxu0 0
    %850 = vmatpush2.bf16.msra.mxu0 0
    %851 = vmatprep.subr.bf16.mxu0 0
    %852 = vmatpush2.bf16.msra.mxu0 0
    %853 = vmatprep.subr.bf16.mxu0 0
    %854 = vmatpush2.bf16.msra.mxu0 0
    %855 = vmatprep.subr.bf16.mxu0 0
    %856 = vmatpush2.bf16.msra.mxu0 0
    %857 = vmatprep.subr.bf16.mxu0 0
    %858 = vmatpush2.bf16.msra.mxu0 0
    %859 = vmatprep.mubr.bf16.mxu0 0
    %860 = vmatmul.mubr.bf16.gmra.mxu0 %v349
    %v861 = vpop.f32.mrf.mxu0
    %v862 = vadd.f32 0.0, %v861
    %v863 = vpop.f32.mrf.mxu0
    %v864 = vpop.f32.mrf.mxu0
    %v865 = vadd.f32 0.0, %v864
    %v866 = vpop.f32.mrf.mxu0
    %867 = vmatprep.mubr.bf16.mxu0 0
    %868 = vmatmul.mubr.bf16.gmra.mxu0 %v350
    %v869 = vpop.f32.mrf.mxu0
    %v870 = vadd.f32 0.0, %v869
    %v871 = vpop.f32.mrf.mxu0
    %v872 = vpop.f32.mrf.mxu0
    %v873 = vadd.f32 0.0, %v872
    %v874 = vpop.f32.mrf.mxu0
    %875 = vmatprep.mubr.bf16.mxu0 0
    %876 = vmatmul.mubr.bf16.gmra.mxu0 %v351
    %v877 = vpop.f32.mrf.mxu0
    %v878 = vadd.f32 0.0, %v877
    %v879 = vpop.f32.mrf.mxu0
    %v880 = vpop.f32.mrf.mxu0
    %v881 = vadd.f32 0.0, %v880
    %v882 = vpop.f32.mrf.mxu0
    %883 = vmatprep.mubr.bf16.mxu0 0
    %884 = vmatmul.mubr.bf16.gmra.mxu0 %v352
    %v885 = vpop.f32.mrf.mxu0
    %v886 = vadd.f32 0.0, %v885
    %v887 = vpop.f32.mrf.mxu0
    %v888 = vpop.f32.mrf.mxu0
    %v889 = vadd.f32 0.0, %v888
    %v890 = vpop.f32.mrf.mxu0
    %891 = vdwg.mxu0
    %v892 = vadd.f32 %v755, %v862
    %v893 = vadd.f32 %v756, %v865
    %v894 = vadd.f32 %v757, %v870
    %v895 = vadd.f32 %v758, %v873
    %v896 = vadd.f32 %v759, %v878
    %v897 = vadd.f32 %v760, %v881
    %v898 = vadd.f32 %v761, %v886
    %v899 = vadd.f32 %v762, %v889
    %v900 = vpack.c.bf16 %v893, %v892
    %v901 = vpack.c.bf16 %v895, %v894
    %v902 = vpack.c.bf16 %v897, %v896
    %v903 = vpack.c.bf16 %v899, %v898
    %904 = vmatprep.subr.bf16.mxu0 0
    %905 = vmatpush1.bf16.msra.mxu0 0
    %906 = vmatprep.subr.bf16.mxu0 0
    %907 = vmatpush1.bf16.msra.mxu0 0
    %908 = vmatprep.subr.bf16.mxu0 0
    %909 = vmatpush1.bf16.msra.mxu0 0
    %910 = vmatprep.subr.bf16.mxu0 0
    %911 = vmatpush1.bf16.msra.mxu0 0
    %912 = vmatprep.subr.bf16.mxu0 0
    %913 = vmatpush1.bf16.msra.mxu0 %v903
    %914 = vmatprep.subr.bf16.mxu0 0
    %915 = vmatpush1.bf16.msra.mxu0 %v902
    %916 = vmatprep.subr.bf16.mxu0 0
    %917 = vmatpush1.bf16.msra.mxu0 %v901
    %918 = vmatprep.subr.bf16.mxu0 0
    %919 = vmatpush1.bf16.msra.mxu0 %v900
    %920 = vmatprep.subr.bf16.mxu0 0
    %921 = vmatpush2.bf16.msra.mxu0 0
    %922 = vmatprep.subr.bf16.mxu0 0
    %923 = vmatpush2.bf16.msra.mxu0 0
    %924 = vmatprep.subr.bf16.mxu0 0
    %925 = vmatpush2.bf16.msra.mxu0 0
    %926 = vmatprep.subr.bf16.mxu0 0
    %927 = vmatpush2.bf16.msra.mxu0 0
    %928 = vmatprep.subr.bf16.mxu0 0
    %929 = vmatpush2.bf16.msra.mxu0 0
    %930 = vmatprep.subr.bf16.mxu0 0
    %931 = vmatpush2.bf16.msra.mxu0 0
    %932 = vmatprep.subr.bf16.mxu0 0
    %933 = vmatpush2.bf16.msra.mxu0 0
    %934 = vmatprep.subr.bf16.mxu0 0
    %935 = vmatpush2.bf16.msra.mxu0 0
    %936 = vmatprep.mubr.bf16.mxu0 0
    %937 = vmatmul.mubr.bf16.gmra.mxu0 %v177
    %v938 = vpop.f32.mrf.mxu0
    %v939 = vadd.f32 0.0, %v938
    %v940 = vpop.f32.mrf.mxu0
    %v941 = vpop.f32.mrf.mxu0
    %v942 = vadd.f32 0.0, %v941
    %v943 = vpop.f32.mrf.mxu0
    %944 = vmatprep.mubr.bf16.mxu0 0
    %945 = vmatmul.mubr.bf16.gmra.mxu0 %v180
    %v946 = vpop.f32.mrf.mxu0
    %v947 = vadd.f32 0.0, %v946
    %v948 = vpop.f32.mrf.mxu0
    %v949 = vpop.f32.mrf.mxu0
    %v950 = vadd.f32 0.0, %v949
    %v951 = vpop.f32.mrf.mxu0
    %952 = vmatprep.mubr.bf16.mxu0 0
    %953 = vmatmul.mubr.bf16.gmra.mxu0 %v183
    %v954 = vpop.f32.mrf.mxu0
    %v955 = vadd.f32 0.0, %v954
    %v956 = vpop.f32.mrf.mxu0
    %v957 = vpop.f32.mrf.mxu0
    %v958 = vadd.f32 0.0, %v957
    %v959 = vpop.f32.mrf.mxu0
    %960 = vmatprep.mubr.bf16.mxu0 0
    %961 = vmatmul.mubr.bf16.gmra.mxu0 %v186
    %v962 = vpop.f32.mrf.mxu0
    %v963 = vadd.f32 0.0, %v962
    %v964 = vpop.f32.mrf.mxu0
    %v965 = vpop.f32.mrf.mxu0
    %v966 = vadd.f32 0.0, %v965
    %v967 = vpop.f32.mrf.mxu0
    %968 = vmatprep.mubr.bf16.mxu0 0
    %969 = vmatmul.mubr.bf16.gmra.mxu0 %v189
    %v970 = vpop.f32.mrf.mxu0
    %v971 = vadd.f32 0.0, %v970
    %v972 = vpop.f32.mrf.mxu0
    %v973 = vpop.f32.mrf.mxu0
    %v974 = vadd.f32 0.0, %v973
    %v975 = vpop.f32.mrf.mxu0
    %976 = vmatprep.mubr.bf16.mxu0 0
    %977 = vmatmul.mubr.bf16.gmra.mxu0 %v192
    %v978 = vpop.f32.mrf.mxu0
    %v979 = vadd.f32 0.0, %v978
    %v980 = vpop.f32.mrf.mxu0
    %v981 = vpop.f32.mrf.mxu0
    %v982 = vadd.f32 0.0, %v981
    %v983 = vpop.f32.mrf.mxu0
    %984 = vmatprep.mubr.bf16.mxu0 0
    %985 = vmatmul.mubr.bf16.gmra.mxu0 %v195
    %v986 = vpop.f32.mrf.mxu0
    %v987 = vadd.f32 0.0, %v986
    %v988 = vpop.f32.mrf.mxu0
    %v989 = vpop.f32.mrf.mxu0
    %v990 = vadd.f32 0.0, %v989
    %v991 = vpop.f32.mrf.mxu0
    %992 = vmatprep.mubr.bf16.mxu0 0
    %993 = vmatmul.mubr.bf16.gmra.mxu0 %v198
    %v994 = vpop.f32.mrf.mxu0
    %v995 = vadd.f32 0.0, %v994
    %v996 = vpop.f32.mrf.mxu0
    %v997 = vpop.f32.mrf.mxu0
    %v998 = vadd.f32 0.0, %v997
    %v999 = vpop.f32.mrf.mxu0
    %1000 = vmatprep.mubr.bf16.mxu0 0
    %1001 = vmatmul.mubr.bf16.gmra.mxu0 %v201
    %v1002 = vpop.f32.mrf.mxu0
    %v1003 = vadd.f32 0.0, %v1002
    %v1004 = vpop.f32.mrf.mxu0
    %v1005 = vpop.f32.mrf.mxu0
    %v1006 = vadd.f32 0.0, %v1005
    %v1007 = vpop.f32.mrf.mxu0
    %1008 = vmatprep.mubr.bf16.mxu0 0
    %1009 = vmatmul.mubr.bf16.gmra.mxu0 %v204
    %v1010 = vpop.f32.mrf.mxu0
    %v1011 = vadd.f32 0.0, %v1010
    %v1012 = vpop.f32.mrf.mxu0
    %v1013 = vpop.f32.mrf.mxu0
    %v1014 = vadd.f32 0.0, %v1013
    %v1015 = vpop.f32.mrf.mxu0
    %1016 = vmatprep.mubr.bf16.mxu0 0
    %1017 = vmatmul.mubr.bf16.gmra.mxu0 %v207
    %v1018 = vpop.f32.mrf.mxu0
    %v1019 = vadd.f32 0.0, %v1018
    %v1020 = vpop.f32.mrf.mxu0
    %v1021 = vpop.f32.mrf.mxu0
    %v1022 = vadd.f32 0.0, %v1021
    %v1023 = vpop.f32.mrf.mxu0
    %1024 = vmatprep.mubr.bf16.mxu0 0
    %1025 = vmatmul.mubr.bf16.gmra.mxu0 %v210
    %v1026 = vpop.f32.mrf.mxu0
    %v1027 = vadd.f32 0.0, %v1026
    %v1028 = vpop.f32.mrf.mxu0
    %v1029 = vpop.f32.mrf.mxu0
    %v1030 = vadd.f32 0.0, %v1029
    %v1031 = vpop.f32.mrf.mxu0
    %1032 = vdwg.mxu0
    %v1033 = vpack.c.bf16 %v942, %v939
    %v1034 = vpack.c.bf16 %v950, %v947
    %v1035 = vpack.c.bf16 %v958, %v955
    %v1036 = vpack.c.bf16 %v966, %v963
    %v1037 = vpack.c.bf16 %v974, %v971
    %v1038 = vpack.c.bf16 %v982, %v979
    %v1039 = vpack.c.bf16 %v990, %v987
    %v1040 = vpack.c.bf16 %v998, %v995
    %v1041 = vpack.c.bf16 %v1006, %v1003
    %v1042 = vpack.c.bf16 %v1014, %v1011
    %v1043 = vpack.c.bf16 %v1022, %v1019
    %v1044 = vpack.c.bf16 %v1030, %v1027
    %v1045 = vld [vmem:[%s6] sm:$0xf]
    %v1046 = vld [vmem:[%s6 + $0x4] sm:$0xf]
    %v1047 = vld [vmem:[%s6 + $0x8] sm:$0xf]
    %v1048 = vld [vmem:[%s6 + $0xc] sm:$0xf]
    %v1049 = vld [vmem:[%s6 + $0x10] sm:$0xf]
    %v1050 = vld [vmem:[%s6 + $0x14] sm:$0xf]
    %v1051 = vld [vmem:[%s6 + $0x18] sm:$0xf]
    %v1052 = vld [vmem:[%s6 + $0x1c] sm:$0xf]
    %v1053 = vld [vmem:[%s6 + $0x20] sm:$0xf]
    %v1054 = vld [vmem:[%s6 + $0x24] sm:$0xf]
    %v1055 = vld [vmem:[%s6 + $0x28] sm:$0xf]
    %v1056 = vld [vmem:[%s6 + $0x2c] sm:$0xf]
    %v1057 = vld [vmem:[%s6 + $0x30] sm:$0xf]
    %v1058 = vld [vmem:[%s6 + $0x34] sm:$0xf]
    %v1059 = vld [vmem:[%s6 + $0x38] sm:$0xf]
    %v1060 = vld [vmem:[%s6 + $0x3c] sm:$0xf]
    %v1061 = vld [vmem:[%s7] sm:$0x1]
    %v1063 = vlaneseq
    %v1064 = vshrl.u32 %v1063, 7
    %v1065 = vsub.s32 0, %v1064
    %v1066 = vrot.slane %v1061, %v1065
    %v1084 = vunpack.c.l.b16 %v1045
    %v1085 = vunpack.c.l.b16 %v1046
    %v1086 = vunpack.c.l.b16 %v1047
    %v1087 = vunpack.c.l.b16 %v1048
    %v1088 = vunpack.c.l.b16 %v1049
    %v1089 = vunpack.c.l.b16 %v1050
    %v1090 = vunpack.c.l.b16 %v1051
    %v1091 = vunpack.c.l.b16 %v1052
    %v1092 = vunpack.c.l.b16 %v1053
    %v1093 = vunpack.c.l.b16 %v1054
    %v1094 = vunpack.c.l.b16 %v1055
    %v1095 = vunpack.c.l.b16 %v1056
    %v1096 = vunpack.c.l.b16 %v1057
    %v1097 = vunpack.c.l.b16 %v1058
    %v1098 = vunpack.c.l.b16 %v1059
    %v1099 = vunpack.c.l.b16 %v1060
    %v1100 = vpack.c.b16 %v1085, %v1084
    %v1101 = vpack.c.b16 %v1087, %v1086
    %v1102 = vpack.c.b16 %v1089, %v1088
    %v1103 = vpack.c.b16 %v1091, %v1090
    %v1104 = vpack.c.b16 %v1093, %v1092
    %v1105 = vpack.c.b16 %v1095, %v1094
    %v1106 = vpack.c.b16 %v1097, %v1096
    %v1107 = vpack.c.b16 %v1099, %v1098
    %1116 = vmatprep.subr.bf16.mxu0 0
    %1117 = vmatpush1.bf16.msra.mxu0 %v1107
    %1118 = vmatprep.subr.bf16.mxu0 0
    %1119 = vmatpush1.bf16.msra.mxu0 %v1106
    %1120 = vmatprep.subr.bf16.mxu0 0
    %1121 = vmatpush1.bf16.msra.mxu0 %v1105
    %1122 = vmatprep.subr.bf16.mxu0 0
    %1123 = vmatpush1.bf16.msra.mxu0 %v1104
    %1124 = vmatprep.subr.bf16.mxu0 0
    %1125 = vmatpush1.bf16.msra.mxu0 %v1103
    %1126 = vmatprep.subr.bf16.mxu0 0
    %1127 = vmatpush1.bf16.msra.mxu0 %v1102
    %1128 = vmatprep.subr.bf16.mxu0 0
    %1129 = vmatpush1.bf16.msra.mxu0 %v1101
    %1130 = vmatprep.subr.bf16.mxu0 0
    %1131 = vmatpush1.bf16.msra.mxu0 %v1100
    %1132 = vmatprep.subr.bf16.mxu0 0
    %1133 = vmatpush2.bf16.msra.mxu0 0
    %1134 = vmatprep.subr.bf16.mxu0 0
    %1135 = vmatpush2.bf16.msra.mxu0 0
    %1136 = vmatprep.subr.bf16.mxu0 0
    %1137 = vmatpush2.bf16.msra.mxu0 0
    %1138 = vmatprep.subr.bf16.mxu0 0
    %1139 = vmatpush2.bf16.msra.mxu0 0
    %1140 = vmatprep.subr.bf16.mxu0 0
    %1141 = vmatpush2.bf16.msra.mxu0 0
    %1142 = vmatprep.subr.bf16.mxu0 0
    %1143 = vmatpush2.bf16.msra.mxu0 0
    %1144 = vmatprep.subr.bf16.mxu0 0
    %1145 = vmatpush2.bf16.msra.mxu0 0
    %1146 = vmatprep.subr.bf16.mxu0 0
    %1147 = vmatpush2.bf16.msra.mxu0 0
    %1148 = vmatprep.mubr.bf16.mxu0 0
    %1149 = vmatmul.mubr.bf16.gmra.mxu0 %v900
    %v1150 = vpop.f32.mrf.mxu0
    %v1151 = vadd.f32 %v1066, %v1150
    %v1152 = vpop.f32.mrf.mxu0
    %v1153 = vpop.f32.mrf.mxu0
    %v1154 = vadd.f32 %v1066, %v1153
    %v1155 = vpop.f32.mrf.mxu0
    %1156 = vmatprep.mubr.bf16.mxu0 0
    %1157 = vmatmul.mubr.bf16.gmra.mxu0 %v901
    %v1158 = vpop.f32.mrf.mxu0
    %v1159 = vadd.f32 %v1066, %v1158
    %v1160 = vpop.f32.mrf.mxu0
    %v1161 = vpop.f32.mrf.mxu0
    %v1162 = vadd.f32 %v1066, %v1161
    %v1163 = vpop.f32.mrf.mxu0
    %1164 = vmatprep.mubr.bf16.mxu0 0
    %1165 = vmatmul.mubr.bf16.gmra.mxu0 %v902
    %v1166 = vpop.f32.mrf.mxu0
    %v1167 = vadd.f32 %v1066, %v1166
    %v1168 = vpop.f32.mrf.mxu0
    %v1169 = vpop.f32.mrf.mxu0
    %v1170 = vadd.f32 %v1066, %v1169
    %v1171 = vpop.f32.mrf.mxu0
    %1172 = vmatprep.mubr.bf16.mxu0 0
    %1173 = vmatmul.mubr.bf16.gmra.mxu0 %v903
    %v1174 = vpop.f32.mrf.mxu0
    %v1175 = vadd.f32 %v1066, %v1174
    %v1176 = vpop.f32.mrf.mxu0
    %v1177 = vpop.f32.mrf.mxu0
    %v1178 = vadd.f32 %v1066, %v1177
    %v1179 = vpop.f32.mrf.mxu0
    %1180 = vdwg.mxu0
    %v1181 = vld [vmem:[#allocation5] sm:$0xf]
    %v1182 = vld [vmem:[#allocation5 + $0x4] sm:$0xf]
    %v1183 = vld [vmem:[#allocation5 + $0x8] sm:$0xf]
    %v1184 = vld [vmem:[#allocation5 + $0xc] sm:$0xf]
    %v1185 = vld [vmem:[#allocation5 + $0x10] sm:$0xf]
    %v1186 = vld [vmem:[#allocation5 + $0x14] sm:$0xf]
    %v1187 = vld [vmem:[#allocation5 + $0x18] sm:$0xf]
    %v1188 = vld [vmem:[#allocation5 + $0x1c] sm:$0xf]
    %v1189 = vld [vmem:[#allocation5 + $0x20] sm:$0xf]
    %v1190 = vld [vmem:[#allocation5 + $0x24] sm:$0xf]
    %v1191 = vld [vmem:[#allocation5 + $0x28] sm:$0xf]
    %v1192 = vld [vmem:[#allocation5 + $0x2c] sm:$0xf]
    %v1193 = vld [vmem:[#allocation5 + $0x30] sm:$0xf]
    %v1194 = vld [vmem:[#allocation5 + $0x34] sm:$0xf]
    %v1195 = vld [vmem:[#allocation5 + $0x38] sm:$0xf]
    %v1196 = vld [vmem:[#allocation5 + $0x3c] sm:$0xf]
    %v1213 = vunpack.c.l.b16 %v1181
    %v1214 = vunpack.c.l.b16 %v1182
    %v1215 = vunpack.c.l.b16 %v1183
    %v1216 = vunpack.c.l.b16 %v1184
    %v1217 = vunpack.c.l.b16 %v1185
    %v1218 = vunpack.c.l.b16 %v1186
    %v1219 = vunpack.c.l.b16 %v1187
    %v1220 = vunpack.c.l.b16 %v1188
    %v1221 = vunpack.c.l.b16 %v1189
    %v1222 = vunpack.c.l.b16 %v1190
    %v1223 = vunpack.c.l.b16 %v1191
    %v1224 = vunpack.c.l.b16 %v1192
    %v1225 = vunpack.c.l.b16 %v1193
    %v1226 = vunpack.c.l.b16 %v1194
    %v1227 = vunpack.c.l.b16 %v1195
    %v1228 = vunpack.c.l.b16 %v1196
    %v1229 = vpack.c.b16 %v1214, %v1213
    %v1230 = vpack.c.b16 %v1216, %v1215
    %v1231 = vpack.c.b16 %v1218, %v1217
    %v1232 = vpack.c.b16 %v1220, %v1219
    %v1233 = vpack.c.b16 %v1222, %v1221
    %v1234 = vpack.c.b16 %v1224, %v1223
    %v1235 = vpack.c.b16 %v1226, %v1225
    %v1236 = vpack.c.b16 %v1228, %v1227
    %1245 = vmatprep.subr.bf16.mxu0 0
    %1246 = vmatpush1.bf16.msra.mxu0 %v1236
    %1247 = vmatprep.subr.bf16.mxu0 0
    %1248 = vmatpush1.bf16.msra.mxu0 %v1235
    %1249 = vmatprep.subr.bf16.mxu0 0
    %1250 = vmatpush1.bf16.msra.mxu0 %v1234
    %1251 = vmatprep.subr.bf16.mxu0 0
    %1252 = vmatpush1.bf16.msra.mxu0 %v1233
    %1253 = vmatprep.subr.bf16.mxu0 0
    %1254 = vmatpush1.bf16.msra.mxu0 %v1232
    %1255 = vmatprep.subr.bf16.mxu0 0
    %1256 = vmatpush1.bf16.msra.mxu0 %v1231
    %1257 = vmatprep.subr.bf16.mxu0 0
    %1258 = vmatpush1.bf16.msra.mxu0 %v1230
    %1259 = vmatprep.subr.bf16.mxu0 0
    %1260 = vmatpush1.bf16.msra.mxu0 %v1229
    %1261 = vmatprep.subr.bf16.mxu0 0
    %1262 = vmatpush2.bf16.msra.mxu0 0
    %1263 = vmatprep.subr.bf16.mxu0 0
    %1264 = vmatpush2.bf16.msra.mxu0 0
    %1265 = vmatprep.subr.bf16.mxu0 0
    %1266 = vmatpush2.bf16.msra.mxu0 0
    %1267 = vmatprep.subr.bf16.mxu0 0
    %1268 = vmatpush2.bf16.msra.mxu0 0
    %1269 = vmatprep.subr.bf16.mxu0 0
    %1270 = vmatpush2.bf16.msra.mxu0 0
    %1271 = vmatprep.subr.bf16.mxu0 0
    %1272 = vmatpush2.bf16.msra.mxu0 0
    %1273 = vmatprep.subr.bf16.mxu0 0
    %1274 = vmatpush2.bf16.msra.mxu0 0
    %1275 = vmatprep.subr.bf16.mxu0 0
    %1276 = vmatpush2.bf16.msra.mxu0 0
    %1277 = vmatprep.mubr.bf16.mxu0 0
    %1278 = vmatmul.mubr.bf16.gmra.mxu0 %v1033
    %v1279 = vpop.f32.mrf.mxu0
    %v1280 = vadd.f32 0.0, %v1279
    %v1281 = vpop.f32.mrf.mxu0
    %v1282 = vpop.f32.mrf.mxu0
    %v1283 = vadd.f32 0.0, %v1282
    %v1284 = vpop.f32.mrf.mxu0
    %1285 = vmatprep.mubr.bf16.mxu0 0
    %1286 = vmatmul.mubr.bf16.gmra.mxu0 %v1034
    %v1287 = vpop.f32.mrf.mxu0
    %v1288 = vadd.f32 0.0, %v1287
    %v1289 = vpop.f32.mrf.mxu0
    %v1290 = vpop.f32.mrf.mxu0
    %v1291 = vadd.f32 0.0, %v1290
    %v1292 = vpop.f32.mrf.mxu0
    %1293 = vmatprep.mubr.bf16.mxu0 0
    %1294 = vmatmul.mubr.bf16.gmra.mxu0 %v1035
    %v1295 = vpop.f32.mrf.mxu0
    %v1296 = vadd.f32 0.0, %v1295
    %v1297 = vpop.f32.mrf.mxu0
    %v1298 = vpop.f32.mrf.mxu0
    %v1299 = vadd.f32 0.0, %v1298
    %v1300 = vpop.f32.mrf.mxu0
    %1301 = vmatprep.mubr.bf16.mxu0 0
    %1302 = vmatmul.mubr.bf16.gmra.mxu0 %v1036
    %v1303 = vpop.f32.mrf.mxu0
    %v1304 = vadd.f32 0.0, %v1303
    %v1305 = vpop.f32.mrf.mxu0
    %v1306 = vpop.f32.mrf.mxu0
    %v1307 = vadd.f32 0.0, %v1306
    %v1308 = vpop.f32.mrf.mxu0
    %1309 = vdwg.mxu0
    %v1310 = vadd.f32 %v1151, %v1280
    %v1311 = vadd.f32 %v1154, %v1283
    %v1312 = vadd.f32 %v1159, %v1288
    %v1313 = vadd.f32 %v1162, %v1291
    %v1314 = vadd.f32 %v1167, %v1296
    %v1315 = vadd.f32 %v1170, %v1299
    %v1316 = vadd.f32 %v1175, %v1304
    %v1317 = vadd.f32 %v1178, %v1307
    %v1318 = vld [vmem:[#allocation5 + $0x40] sm:$0xf]
    %v1319 = vld [vmem:[#allocation5 + $0x44] sm:$0xf]
    %v1320 = vld [vmem:[#allocation5 + $0x48] sm:$0xf]
    %v1321 = vld [vmem:[#allocation5 + $0x4c] sm:$0xf]
    %v1322 = vld [vmem:[#allocation5 + $0x50] sm:$0xf]
    %v1323 = vld [vmem:[#allocation5 + $0x54] sm:$0xf]
    %v1324 = vld [vmem:[#allocation5 + $0x58] sm:$0xf]
    %v1325 = vld [vmem:[#allocation5 + $0x5c] sm:$0xf]
    %v1326 = vld [vmem:[#allocation5 + $0x60] sm:$0xf]
    %v1327 = vld [vmem:[#allocation5 + $0x64] sm:$0xf]
    %v1328 = vld [vmem:[#allocation5 + $0x68] sm:$0xf]
    %v1329 = vld [vmem:[#allocation5 + $0x6c] sm:$0xf]
    %v1330 = vld [vmem:[#allocation5 + $0x70] sm:$0xf]
    %v1331 = vld [vmem:[#allocation5 + $0x74] sm:$0xf]
    %v1332 = vld [vmem:[#allocation5 + $0x78] sm:$0xf]
    %v1333 = vld [vmem:[#allocation5 + $0x7c] sm:$0xf]
    %v1350 = vunpack.c.l.b16 %v1318
    %v1351 = vunpack.c.l.b16 %v1319
    %v1352 = vunpack.c.l.b16 %v1320
    %v1353 = vunpack.c.l.b16 %v1321
    %v1354 = vunpack.c.l.b16 %v1322
    %v1355 = vunpack.c.l.b16 %v1323
    %v1356 = vunpack.c.l.b16 %v1324
    %v1357 = vunpack.c.l.b16 %v1325
    %v1358 = vunpack.c.l.b16 %v1326
    %v1359 = vunpack.c.l.b16 %v1327
    %v1360 = vunpack.c.l.b16 %v1328
    %v1361 = vunpack.c.l.b16 %v1329
    %v1362 = vunpack.c.l.b16 %v1330
    %v1363 = vunpack.c.l.b16 %v1331
    %v1364 = vunpack.c.l.b16 %v1332
    %v1365 = vunpack.c.l.b16 %v1333
    %v1366 = vpack.c.b16 %v1351, %v1350
    %v1367 = vpack.c.b16 %v1353, %v1352
    %v1368 = vpack.c.b16 %v1355, %v1354
    %v1369 = vpack.c.b16 %v1357, %v1356
    %v1370 = vpack.c.b16 %v1359, %v1358
    %v1371 = vpack.c.b16 %v1361, %v1360
    %v1372 = vpack.c.b16 %v1363, %v1362
    %v1373 = vpack.c.b16 %v1365, %v1364
    %1382 = vmatprep.subr.bf16.mxu0 0
    %1383 = vmatpush1.bf16.msra.mxu0 %v1373
    %1384 = vmatprep.subr.bf16.mxu0 0
    %1385 = vmatpush1.bf16.msra.mxu0 %v1372
    %1386 = vmatprep.subr.bf16.mxu0 0
    %1387 = vmatpush1.bf16.msra.mxu0 %v1371
    %1388 = vmatprep.subr.bf16.mxu0 0
    %1389 = vmatpush1.bf16.msra.mxu0 %v1370
    %1390 = vmatprep.subr.bf16.mxu0 0
    %1391 = vmatpush1.bf16.msra.mxu0 %v1369
    %1392 = vmatprep.subr.bf16.mxu0 0
    %1393 = vmatpush1.bf16.msra.mxu0 %v1368
    %1394 = vmatprep.subr.bf16.mxu0 0
    %1395 = vmatpush1.bf16.msra.mxu0 %v1367
    %1396 = vmatprep.subr.bf16.mxu0 0
    %1397 = vmatpush1.bf16.msra.mxu0 %v1366
    %1398 = vmatprep.subr.bf16.mxu0 0
    %1399 = vmatpush2.bf16.msra.mxu0 0
    %1400 = vmatprep.subr.bf16.mxu0 0
    %1401 = vmatpush2.bf16.msra.mxu0 0
    %1402 = vmatprep.subr.bf16.mxu0 0
    %1403 = vmatpush2.bf16.msra.mxu0 0
    %1404 = vmatprep.subr.bf16.mxu0 0
    %1405 = vmatpush2.bf16.msra.mxu0 0
    %1406 = vmatprep.subr.bf16.mxu0 0
    %1407 = vmatpush2.bf16.msra.mxu0 0
    %1408 = vmatprep.subr.bf16.mxu0 0
    %1409 = vmatpush2.bf16.msra.mxu0 0
    %1410 = vmatprep.subr.bf16.mxu0 0
    %1411 = vmatpush2.bf16.msra.mxu0 0
    %1412 = vmatprep.subr.bf16.mxu0 0
    %1413 = vmatpush2.bf16.msra.mxu0 0
    %1414 = vmatprep.mubr.bf16.mxu0 0
    %1415 = vmatmul.mubr.bf16.gmra.mxu0 %v1037
    %v1416 = vpop.f32.mrf.mxu0
    %v1417 = vadd.f32 0.0, %v1416
    %v1418 = vpop.f32.mrf.mxu0
    %v1419 = vpop.f32.mrf.mxu0
    %v1420 = vadd.f32 0.0, %v1419
    %v1421 = vpop.f32.mrf.mxu0
    %1422 = vmatprep.mubr.bf16.mxu0 0
    %1423 = vmatmul.mubr.bf16.gmra.mxu0 %v1038
    %v1424 = vpop.f32.mrf.mxu0
    %v1425 = vadd.f32 0.0, %v1424
    %v1426 = vpop.f32.mrf.mxu0
    %v1427 = vpop.f32.mrf.mxu0
    %v1428 = vadd.f32 0.0, %v1427
    %v1429 = vpop.f32.mrf.mxu0
    %1430 = vmatprep.mubr.bf16.mxu0 0
    %1431 = vmatmul.mubr.bf16.gmra.mxu0 %v1039
    %v1432 = vpop.f32.mrf.mxu0
    %v1433 = vadd.f32 0.0, %v1432
    %v1434 = vpop.f32.mrf.mxu0
    %v1435 = vpop.f32.mrf.mxu0
    %v1436 = vadd.f32 0.0, %v1435
    %v1437 = vpop.f32.mrf.mxu0
    %1438 = vmatprep.mubr.bf16.mxu0 0
    %1439 = vmatmul.mubr.bf16.gmra.mxu0 %v1040
    %v1440 = vpop.f32.mrf.mxu0
    %v1441 = vadd.f32 0.0, %v1440
    %v1442 = vpop.f32.mrf.mxu0
    %v1443 = vpop.f32.mrf.mxu0
    %v1444 = vadd.f32 0.0, %v1443
    %v1445 = vpop.f32.mrf.mxu0
    %1446 = vdwg.mxu0
    %v1447 = vadd.f32 %v1310, %v1417
    %v1448 = vadd.f32 %v1311, %v1420
    %v1449 = vadd.f32 %v1312, %v1425
    %v1450 = vadd.f32 %v1313, %v1428
    %v1451 = vadd.f32 %v1314, %v1433
    %v1452 = vadd.f32 %v1315, %v1436
    %v1453 = vadd.f32 %v1316, %v1441
    %v1454 = vadd.f32 %v1317, %v1444
    %v1455 = vld [vmem:[#allocation5 + $0x80] sm:$0xf]
    %v1456 = vld [vmem:[#allocation5 + $0x84] sm:$0xf]
    %v1457 = vld [vmem:[#allocation5 + $0x88] sm:$0xf]
    %v1458 = vld [vmem:[#allocation5 + $0x8c] sm:$0xf]
    %v1459 = vld [vmem:[#allocation5 + $0x90] sm:$0xf]
    %v1460 = vld [vmem:[#allocation5 + $0x94] sm:$0xf]
    %v1461 = vld [vmem:[#allocation5 + $0x98] sm:$0xf]
    %v1462 = vld [vmem:[#allocation5 + $0x9c] sm:$0xf]
    %v1463 = vld [vmem:[#allocation5 + $0xa0] sm:$0xf]
    %v1464 = vld [vmem:[#allocation5 + $0xa4] sm:$0xf]
    %v1465 = vld [vmem:[#allocation5 + $0xa8] sm:$0xf]
    %v1466 = vld [vmem:[#allocation5 + $0xac] sm:$0xf]
    %v1467 = vld [vmem:[#allocation5 + $0xb0] sm:$0xf]
    %v1468 = vld [vmem:[#allocation5 + $0xb4] sm:$0xf]
    %v1469 = vld [vmem:[#allocation5 + $0xb8] sm:$0xf]
    %v1470 = vld [vmem:[#allocation5 + $0xbc] sm:$0xf]
    %v1487 = vunpack.c.l.b16 %v1455
    %v1488 = vunpack.c.l.b16 %v1456
    %v1489 = vunpack.c.l.b16 %v1457
    %v1490 = vunpack.c.l.b16 %v1458
    %v1491 = vunpack.c.l.b16 %v1459
    %v1492 = vunpack.c.l.b16 %v1460
    %v1493 = vunpack.c.l.b16 %v1461
    %v1494 = vunpack.c.l.b16 %v1462
    %v1495 = vunpack.c.l.b16 %v1463
    %v1496 = vunpack.c.l.b16 %v1464
    %v1497 = vunpack.c.l.b16 %v1465
    %v1498 = vunpack.c.l.b16 %v1466
    %v1499 = vunpack.c.l.b16 %v1467
    %v1500 = vunpack.c.l.b16 %v1468
    %v1501 = vunpack.c.l.b16 %v1469
    %v1502 = vunpack.c.l.b16 %v1470
    %v1503 = vpack.c.b16 %v1488, %v1487
    %v1504 = vpack.c.b16 %v1490, %v1489
    %v1505 = vpack.c.b16 %v1492, %v1491
    %v1506 = vpack.c.b16 %v1494, %v1493
    %v1507 = vpack.c.b16 %v1496, %v1495
    %v1508 = vpack.c.b16 %v1498, %v1497
    %v1509 = vpack.c.b16 %v1500, %v1499
    %v1510 = vpack.c.b16 %v1502, %v1501
    %1519 = vmatprep.subr.bf16.mxu0 0
    %1520 = vmatpush1.bf16.msra.mxu0 %v1510
    %1521 = vmatprep.subr.bf16.mxu0 0
    %1522 = vmatpush1.bf16.msra.mxu0 %v1509
    %1523 = vmatprep.subr.bf16.mxu0 0
    %1524 = vmatpush1.bf16.msra.mxu0 %v1508
    %1525 = vmatprep.subr.bf16.mxu0 0
    %1526 = vmatpush1.bf16.msra.mxu0 %v1507
    %1527 = vmatprep.subr.bf16.mxu0 0
    %1528 = vmatpush1.bf16.msra.mxu0 %v1506
    %1529 = vmatprep.subr.bf16.mxu0 0
    %1530 = vmatpush1.bf16.msra.mxu0 %v1505
    %1531 = vmatprep.subr.bf16.mxu0 0
    %1532 = vmatpush1.bf16.msra.mxu0 %v1504
    %1533 = vmatprep.subr.bf16.mxu0 0
    %1534 = vmatpush1.bf16.msra.mxu0 %v1503
    %1535 = vmatprep.subr.bf16.mxu0 0
    %1536 = vmatpush2.bf16.msra.mxu0 0
    %1537 = vmatprep.subr.bf16.mxu0 0
    %1538 = vmatpush2.bf16.msra.mxu0 0
    %1539 = vmatprep.subr.bf16.mxu0 0
    %1540 = vmatpush2.bf16.msra.mxu0 0
    %1541 = vmatprep.subr.bf16.mxu0 0
    %1542 = vmatpush2.bf16.msra.mxu0 0
    %1543 = vmatprep.subr.bf16.mxu0 0
    %1544 = vmatpush2.bf16.msra.mxu0 0
    %1545 = vmatprep.subr.bf16.mxu0 0
    %1546 = vmatpush2.bf16.msra.mxu0 0
    %1547 = vmatprep.subr.bf16.mxu0 0
    %1548 = vmatpush2.bf16.msra.mxu0 0
    %1549 = vmatprep.subr.bf16.mxu0 0
    %1550 = vmatpush2.bf16.msra.mxu0 0
    %1551 = vmatprep.mubr.bf16.mxu0 0
    %1552 = vmatmul.mubr.bf16.gmra.mxu0 %v1041
    %v1553 = vpop.f32.mrf.mxu0
    %v1554 = vadd.f32 0.0, %v1553
    %v1555 = vpop.f32.mrf.mxu0
    %v1556 = vpop.f32.mrf.mxu0
    %v1557 = vadd.f32 0.0, %v1556
    %v1558 = vpop.f32.mrf.mxu0
    %1559 = vmatprep.mubr.bf16.mxu0 0
    %1560 = vmatmul.mubr.bf16.gmra.mxu0 %v1042
    %v1561 = vpop.f32.mrf.mxu0
    %v1562 = vadd.f32 0.0, %v1561
    %v1563 = vpop.f32.mrf.mxu0
    %v1564 = vpop.f32.mrf.mxu0
    %v1565 = vadd.f32 0.0, %v1564
    %v1566 = vpop.f32.mrf.mxu0
    %1567 = vmatprep.mubr.bf16.mxu0 0
    %1568 = vmatmul.mubr.bf16.gmra.mxu0 %v1043
    %v1569 = vpop.f32.mrf.mxu0
    %v1570 = vadd.f32 0.0, %v1569
    %v1571 = vpop.f32.mrf.mxu0
    %v1572 = vpop.f32.mrf.mxu0
    %v1573 = vadd.f32 0.0, %v1572
    %v1574 = vpop.f32.mrf.mxu0
    %1575 = vmatprep.mubr.bf16.mxu0 0
    %1576 = vmatmul.mubr.bf16.gmra.mxu0 %v1044
    %v1577 = vpop.f32.mrf.mxu0
    %v1578 = vadd.f32 0.0, %v1577
    %v1579 = vpop.f32.mrf.mxu0
    %v1580 = vpop.f32.mrf.mxu0
    %v1581 = vadd.f32 0.0, %v1580
    %v1582 = vpop.f32.mrf.mxu0
    %1583 = vdwg.mxu0
    %v1584 = vadd.f32 %v1447, %v1554
    %v1585 = vadd.f32 %v1448, %v1557
    %v1586 = vadd.f32 %v1449, %v1562
    %v1587 = vadd.f32 %v1450, %v1565
    %v1588 = vadd.f32 %v1451, %v1570
    %v1589 = vadd.f32 %v1452, %v1573
    %v1590 = vadd.f32 %v1453, %v1578
    %v1591 = vadd.f32 %v1454, %v1581
    %1592 = vst [vmem:[#allocation7] sm:$0xff] %v1584
    %1593 = vst [vmem:[#allocation7 + $0x8] sm:$0xff] %v1585
    %1594 = vst [vmem:[#allocation7 + $0x10] sm:$0xff] %v1586
    %1595 = vst [vmem:[#allocation7 + $0x18] sm:$0xff] %v1587
    %1596 = vst [vmem:[#allocation7 + $0x20] sm:$0xff] %v1588
    %1597 = vst [vmem:[#allocation7 + $0x28] sm:$0xff] %v1589
    %1598 = vst [vmem:[#allocation7 + $0x30] sm:$0xff] %v1590
    %1599 = vst [vmem:[#allocation7 + $0x38] sm:$0xff] %v1591
    // Predicated region
    $region42: #{tpu_custom_call.1} parent=1 // pred_check
      _
    $region43: #{tpu_custom_call.1} parent=1 // pred_check_branch
      %1601 = sbr.rel (0) target = $region45
    $region44: #{tpu_custom_call.1} parent=1 // pred_region
      %s1603 = ssub.s32 1024, 1024
      %1604 = vsyncadd [#allocation4], %s1603
      %s1605 = sshll.u32 [#allocation7], 4
      %s1606 = int_to_ptr.vmem [resolvable:$true] %s1605
      %1611 = dma.vmem_to_hbm [thread:$0]  %s1606, 1024, %s8, [#allocation4], 128, 128, 8
    $region45: #{tpu_custom_call.1} parent=1 // pred_fallthru
      _
    // Predicated region
    $region46: #{tpu_custom_call.1} parent=1 // pred_check
      _
    $region47: #{tpu_custom_call.1} parent=1 // pred_check_branch
      %1613 = sbr.rel (0) target = $region49
    $region48: #{tpu_custom_call.1} parent=1 // pred_region
      %1614 = dma.done [#allocation4], 1024
    $region49: #{tpu_custom_call.1} parent=1 // pred_fallthru
      _
    %1615 = vsyncpa [#allocation3], 1
    %1616 = vsyncpa [#allocation6], 1
    %1617 = vsyncpa [#allocation4], 1

</llo_original>
